<compile_context>
chip_gen: v5e
topology: v5e:2x2
jax: 0.10.0
libtpu: 0.0.40
codegen_flags: <defaults>
</compile_context>

<pallas_src>
import math
import functools

import jax
import jax.numpy as jnp
from jax import lax
from jax.experimental import pallas as pl
from jax.experimental.pallas import tpu as pltpu


def _mha_kernel(q_ref, k_ref, v_ref,
                wq_ref, bq_ref, wk_ref, bk_ref, wv_ref, bv_ref,
                wm_ref, bm_ref,
                *out_and_scratch,
                num_heads, key_size, value_size, compute_dtype, with_attn):
    if with_attn:
        out_ref, attn_ref, kp_scr, vp_scr, ctx_scr = out_and_scratch
    else:
        out_ref, kp_scr, vp_scr, ctx_scr = out_and_scratch
        attn_ref = None

    cd = compute_dtype
    f32 = jnp.float32

    # K/V projections are identical for every q-tile of a batch: compute them once per
    # batch (first q-tile) into VMEM scratch and reuse across the "arbitrary" q-tile axis.
    @pl.when(pl.program_id(1) == 0)
    def _():
        k = k_ref[0]                                                    # (n_v, d_model)
        v = v_ref[0]
        kp = jnp.dot(k, wk_ref[...], preferred_element_type=f32) + bk_ref[...]
        vp = jnp.dot(v, wv_ref[...], preferred_element_type=f32) + bv_ref[...]
        kp_scr[...] = kp.astype(kp_scr.dtype)                           # (n_v, h*key_size)
        vp_scr[...] = vp.astype(vp_scr.dtype)                           # (n_v, h*value_size)

    # Q projection; 1/sqrt(key_size) is already folded into Wq/bq by pack_mha_params.
    q = q_ref[0]                                                        # (block_q, d_model)
    qp = (jnp.dot(q, wq_ref[...], preferred_element_type=f32)
          + bq_ref[...]).astype(cd)                                     # (block_q, h*key_size)
    kp = kp_scr[...]
    vp = vp_scr[...]
    n_v = kp.shape[0]

    for h in range(num_heads):          # unrolled at trace time — no per-head grid overhead
        qh = qp[:, h * key_size:(h + 1) * key_size]                     # (block_q, key_size)
        kh = kp[:, h * key_size:(h + 1) * key_size]                     # (n_v, key_size)
        vh = vp[:, h * value_size:(h + 1) * value_size]                 # (n_v, value_size)

        # scores = qh @ kh^T via a transposed-RHS contraction (no explicit .T relayout).
        s = lax.dot_general(qh, kh, (((1,), (1,)), ((), ())),
                            preferred_element_type=f32)                 # (block_q, n_v)
        m = jnp.max(s, axis=-1, keepdims=True)
        e = jnp.exp(s - m)
        a = e * pl.reciprocal(jnp.sum(e, axis=-1, keepdims=True), approx=True)

        if with_attn:
            # Direct per-head store in torch.cat(..., dim=-1) layout — no concat copy.
            attn_ref[0, :, pl.ds(h * n_v, n_v)] = a.astype(attn_ref.dtype)

        ctx = jnp.dot(a.astype(cd), vh, preferred_element_type=f32)     # (block_q, value_size)
        ctx_scr[:, pl.ds(h * value_size, value_size)] = ctx.astype(ctx_scr.dtype)

    # Single wide output-projection matmul over the concatenated per-head contexts.
    mh = jnp.dot(ctx_scr[...], wm_ref[...], preferred_element_type=f32) + bm_ref[...]
    out_ref[0] = mh.astype(out_ref.dtype)


def pack_mha_params(params, *, num_heads, key_size, value_size, model_size,
                    compute_dtype=jnp.float32):
    """One-time packing (do this OUTSIDE the hot path).

    params = (wq, bq, wk, bk, wv, bv, wm_t, bm) with
      wq/wk/wv: (h, d_model, size); bq/bk/bv: (h, 1, size);
      wm_t: (h, value_size, model_size) (= W_M.weight^T split per head); bm: (1, model_size).
    Returns head-major packed matrices; the 1/sqrt(key_size) scale is folded into Wq/bq,
    and MXU operands are cast to compute_dtype (biases stay f32 for the f32 accumulate).
    """
    wq, bq, wk, bk, wv, bv, wm_t, bm = params
    d_model = wq.shape[1]
    scale = 1.0 / math.sqrt(key_size)

    wq_s = jnp.transpose(wq, (1, 0, 2)).reshape(d_model, num_heads * key_size) * scale
    bq_s = bq.reshape(1, num_heads * key_size) * scale
    wk_s = jnp.transpose(wk, (1, 0, 2)).reshape(d_model, num_heads * key_size)
    bk_s = bk.reshape(1, num_heads * key_size)
    wv_s = jnp.transpose(wv, (1, 0, 2)).reshape(d_model, num_heads * value_size)
    bv_s = bv.reshape(1, num_heads * value_size)
    wm_full = wm_t.reshape(num_heads * value_size, model_size)
    bm_s = bm.reshape(1, model_size)

    cdt = compute_dtype
    return (wq_s.astype(cdt), bq_s.astype(jnp.float32),
            wk_s.astype(cdt), bk_s.astype(jnp.float32),
            wv_s.astype(cdt), bv_s.astype(jnp.float32),
            wm_full.astype(cdt), bm_s.astype(jnp.float32))


def multi_head_attention(Q, K, V, packed_params, *, num_heads, key_size, value_size,
                         model_size, block_q=None, compute_dtype=jnp.float32,
                         return_attention=True, attn_dtype=None,
                         vmem_budget_bytes=24 << 20):
    B, n_q, d_model = Q.shape
    n_v = K.shape[1]
    out_dtype = Q.dtype
    if attn_dtype is None:
        attn_dtype = Q.dtype

    wq_s, bq_s, wk_s, bk_s, wv_s, bv_s, wm_full, bm_s = packed_params

    # Pre-cast activations to the MXU compute dtype in the wrapper (no per-step in-kernel
    # casts of the big operands; halves Q/K/V DMA + VMEM when compute_dtype=bf16).
    Qc = Q.astype(compute_dtype)
    Kc = K.astype(compute_dtype)
    Vc = V.astype(compute_dtype)

    cd_bytes = jnp.dtype(compute_dtype).itemsize
    attn_bytes = jnp.dtype(attn_dtype).itemsize
    out_bytes = jnp.dtype(out_dtype).itemsize
    hk = num_heads * key_size
    hv = num_heads * value_size

    def vmem_estimate(bq):
        est = 0
        est += 2 * bq * d_model * cd_bytes                       # Q block (double-buffered)
        est += 2 * 2 * n_v * d_model * cd_bytes                  # K + V blocks
        est += 2 * (2 * d_model * hk + d_model * hv + hv * model_size) * cd_bytes  # weights
        est += 2 * (2 * hk + hv + model_size) * 4                # biases (f32)
        est += 2 * bq * model_size * out_bytes                   # out block
        if return_attention:
            est += 2 * bq * num_heads * n_v * attn_bytes         # attn block
        est += (n_v * hk + n_v * hv) * cd_bytes                  # kp/vp scratch
        est += bq * hv * cd_bytes                                # ctx scratch
        return est

    if block_q is None:
        if n_q <= 512:
            cands = [n_q]
        else:
            cands = [d for d in (512, 256, 128, 64, 32, 16, 8) if n_q % d == 0] or [n_q]
        block_q = cands[-1]
        for bq in cands:                                         # largest tile under budget
            if vmem_estimate(bq) <= vmem_budget_bytes:
                block_q = bq
                break
    assert n_q % block_q == 0, "n_q must be divisible by block_q"
    grid = (B, n_q // block_q)

    vmem_limit = int(min(128 << 20, max(32 << 20, 2 * vmem_estimate(block_q))))

    kernel = functools.partial(
        _mha_kernel, num_heads=num_heads, key_size=key_size, value_size=value_size,
        compute_dtype=compute_dtype, with_attn=return_attention)

    in_specs = [
        pl.BlockSpec((1, block_q, d_model), lambda b, qi: (b, qi, 0)),   # Q
        pl.BlockSpec((1, n_v, d_model), lambda b, qi: (b, 0, 0)),        # K (per-batch resident)
        pl.BlockSpec((1, n_v, d_model), lambda b, qi: (b, 0, 0)),        # V (per-batch resident)
        pl.BlockSpec((d_model, hk), lambda b, qi: (0, 0)),               # Wq packed (scaled)
        pl.BlockSpec((1, hk), lambda b, qi: (0, 0)),                     # bq packed (scaled)
        pl.BlockSpec((d_model, hk), lambda b, qi: (0, 0)),               # Wk packed
        pl.BlockSpec((1, hk), lambda b, qi: (0, 0)),                     # bk packed
        pl.BlockSpec((d_model, hv), lambda b, qi: (0, 0)),               # Wv packed
        pl.BlockSpec((1, hv), lambda b, qi: (0, 0)),                     # bv packed
        pl.BlockSpec((hv, model_size), lambda b, qi: (0, 0)),            # W_M^T packed
        pl.BlockSpec((1, model_size), lambda b, qi: (0, 0)),             # b_M
    ]
    out_shape = [jax.ShapeDtypeStruct((B, n_q, model_size), out_dtype)]
    out_specs = [pl.BlockSpec((1, block_q, model_size), lambda b, qi: (b, qi, 0))]
    if return_attention:
        out_shape.append(jax.ShapeDtypeStruct((B, n_q, num_heads * n_v), attn_dtype))
        out_specs.append(pl.BlockSpec((1, block_q, num_heads * n_v),
                                      lambda b, qi: (b, qi, 0)))          # lane-dense attn

    scratch_shapes = [
        pltpu.VMEM((n_v, hk), compute_dtype),       # kp (per batch, reused over q-tiles)
        pltpu.VMEM((n_v, hv), compute_dtype),       # vp
        pltpu.VMEM((block_q, hv), compute_dtype),   # concatenated per-head contexts
    ]

    results = pl.pallas_call(
        kernel,
        out_shape=tuple(out_shape),
        grid_spec=pltpu.PrefetchScalarGridSpec(
            num_scalar_prefetch=0,
            grid=grid,
            in_specs=in_specs,
            out_specs=out_specs,
            scratch_shapes=scratch_shapes),
        compiler_params=pltpu.CompilerParams(
            dimension_semantics=("parallel", "arbitrary"),
            vmem_limit_bytes=vmem_limit),
    )(Qc, Kc, Vc, wq_s, bq_s, wk_s, bk_s, wv_s, bv_s, wm_full, bm_s)

    if return_attention:
        mh, attn = results
        return mh, attn
    (mh,) = results
    return mh


def _reference(Q, K, V, params, *, num_heads, key_size):
    wq, bq, wk, bk, wv, bv, wm_t, bm = params
    ctxs, attns = [], []
    for h in range(num_heads):
        qp = Q @ wq[h] + bq[h]
        kp = K @ wk[h] + bk[h]
        vp = V @ wv[h] + bv[h]
        s = jnp.einsum("bqd,bkd->bqk", qp, kp) / math.sqrt(key_size)
        a = jax.nn.softmax(s, axis=-1)
        attns.append(a)
        ctxs.append(jnp.einsum("bqk,bkd->bqd", a, vp))
    stacked_ctx = jnp.concatenate(ctxs, axis=-1)
    stacked_attn = jnp.concatenate(attns, axis=-1)
    wm_full = wm_t.reshape(-1, wm_t.shape[-1])  # (h*value_size, model_size)
    mh = stacked_ctx @ wm_full + bm[0]
    return mh, stacked_attn


if __name__ == "__main__":
    # Small, kernel-friendly sizes consistent with the module.
    B, n_q, n_v = 2, 8, 8
    model_size, key_size, value_size, num_heads = 32, 16, 16, 4

    root = jax.random.PRNGKey(0)
    keys = jax.random.split(root, 12)

    Q = jax.random.normal(keys[0], (B, n_q, model_size), jnp.float32)
    K = jax.random.normal(keys[1], (B, n_v, model_size), jnp.float32)
    V = jax.random.normal(keys[2], (B, n_v, model_size), jnp.float32)

    s = 0.1
    wq = s * jax.random.normal(keys[3], (num_heads, model_size, key_size), jnp.float32)
    bq = s * jax.random.normal(keys[4], (num_heads, 1, key_size), jnp.float32)
    wk = s * jax.random.normal(keys[5], (num_heads, model_size, key_size), jnp.float32)
    bk = s * jax.random.normal(keys[6], (num_heads, 1, key_size), jnp.float32)
    wv = s * jax.random.normal(keys[7], (num_heads, model_size, value_size), jnp.float32)
    bv = s * jax.random.normal(keys[8], (num_heads, 1, value_size), jnp.float32)
    # W_M: Linear(h*value_size -> model_size); stored transposed & split per head.
    wm_t = s * jax.random.normal(keys[9], (num_heads, value_size, model_size), jnp.float32)
    bm = s * jax.random.normal(keys[10], (1, model_size), jnp.float32)

    params = (wq, bq, wk, bk, wv, bv, wm_t, bm)
    mh_expect, attn_expect = _reference(Q, K, V, params, num_heads=num_heads, key_size=key_size)

    # f32 MXU compute path (tight-ish check; softmax uses the approx EUP reciprocal).
    packed_f32 = pack_mha_params(params, num_heads=num_heads, key_size=key_size,
                                 value_size=value_size, model_size=model_size,
                                 compute_dtype=jnp.float32)
    mh, attn = multi_head_attention(
        Q, K, V, packed_f32,
        num_heads=num_heads, key_size=key_size, value_size=value_size,
        model_size=model_size, compute_dtype=jnp.float32, return_attention=True)
    jax.block_until_ready((mh, attn))
    assert mh.shape == (B, n_q, model_size)
    assert attn.shape == (B, n_q, num_heads * n_v)
    assert jnp.allclose(mh, mh_expect, atol=1e-2, rtol=1e-2)
    assert jnp.allclose(attn, attn_expect, atol=1e-2, rtol=1e-2)

    # Output-only path (attention-weights writeback dropped entirely).
    mh_only = multi_head_attention(
        Q, K, V, packed_f32,
        num_heads=num_heads, key_size=key_size, value_size=value_size,
        model_size=model_size, compute_dtype=jnp.float32, return_attention=False)
    jax.block_until_ready(mh_only)
    assert jnp.allclose(mh_only, mh_expect, atol=1e-2, rtol=1e-2)

    # bf16 MXU compute (f32 accumulation, f32 softmax) — recommended for v6e/v7x.
    packed_bf16 = pack_mha_params(params, num_heads=num_heads, key_size=key_size,
                                  value_size=value_size, model_size=model_size,
                                  compute_dtype=jnp.bfloat16)
    mh_bf, attn_bf = multi_head_attention(
        Q, K, V, packed_bf16,
        num_heads=num_heads, key_size=key_size, value_size=value_size,
        model_size=model_size, compute_dtype=jnp.bfloat16, return_attention=True)
    jax.block_until_ready((mh_bf, attn_bf))
    assert jnp.allclose(mh_bf, mh_expect, atol=5e-2, rtol=5e-2)
    assert jnp.allclose(attn_bf, attn_expect, atol=5e-2, rtol=5e-2)

    print("KERNEL_OK")
</pallas_src>

<mosaic_0001>
module attributes {stable_mosaic.version = 11 : i64} {
  func.func @_mha_kernel(%arg0: i32, %arg1: i32, %arg2: memref<1x8x32xf32, #tpu.memory_space<vmem>>, %arg3: memref<1x8x32xf32, #tpu.memory_space<vmem>>, %arg4: memref<1x8x32xf32, #tpu.memory_space<vmem>>, %arg5: memref<32x64xf32, #tpu.memory_space<vmem>>, %arg6: memref<1x64xf32, #tpu.memory_space<vmem>>, %arg7: memref<32x64xf32, #tpu.memory_space<vmem>>, %arg8: memref<1x64xf32, #tpu.memory_space<vmem>>, %arg9: memref<32x64xf32, #tpu.memory_space<vmem>>, %arg10: memref<1x64xf32, #tpu.memory_space<vmem>>, %arg11: memref<64x32xf32, #tpu.memory_space<vmem>>, %arg12: memref<1x32xf32, #tpu.memory_space<vmem>>, %arg13: memref<1x8x32xf32, #tpu.memory_space<vmem>>, %arg14: memref<1x8x32xf32, #tpu.memory_space<vmem>>, %arg15: memref<8x64xf32, #tpu.memory_space<vmem>>, %arg16: memref<8x64xf32, #tpu.memory_space<vmem>>, %arg17: memref<8x64xf32, #tpu.memory_space<vmem>>) attributes {dimension_semantics = [#tpu.dimension_semantics<parallel>, #tpu.dimension_semantics<arbitrary>], iteration_bounds = array<i64: 2, 1>, scalar_prefetch = 0 : i64, scratch_operands = 3 : i64, tpu.core_type = #tpu.core_type<tc>, window_params = [{transform_indices = @transform_0, window_bounds = array<i64: 1, 8, 32>}, {transform_indices = @transform_1, window_bounds = array<i64: 1, 8, 32>}, {transform_indices = @transform_2, window_bounds = array<i64: 1, 8, 32>}, {pipeline_mode = #tpu.pipeline_mode<synchronous>, transform_indices = @transform_3, window_bounds = array<i64: 32, 64>}, {pipeline_mode = #tpu.pipeline_mode<synchronous>, transform_indices = @transform_4, window_bounds = array<i64: 1, 64>}, {pipeline_mode = #tpu.pipeline_mode<synchronous>, transform_indices = @transform_5, window_bounds = array<i64: 32, 64>}, {pipeline_mode = #tpu.pipeline_mode<synchronous>, transform_indices = @transform_6, window_bounds = array<i64: 1, 64>}, {pipeline_mode = #tpu.pipeline_mode<synchronous>, transform_indices = @transform_7, window_bounds = array<i64: 32, 64>}, {pipeline_mode = #tpu.pipeline_mode<synchronous>, transform_indices = @transform_8, window_bounds = array<i64: 1, 64>}, {pipeline_mode = #tpu.pipeline_mode<synchronous>, transform_indices = @transform_9, window_bounds = array<i64: 64, 32>}, {pipeline_mode = #tpu.pipeline_mode<synchronous>, transform_indices = @transform_10, window_bounds = array<i64: 1, 32>}, {transform_indices = @transform_11, window_bounds = array<i64: 1, 8, 32>}, {transform_indices = @transform_12, window_bounds = array<i64: 1, 8, 32>}]} {
    %c0_i32 = arith.constant 0 : i32
    %0 = arith.cmpi eq, %arg1, %c0_i32 : i32
    %1 = arith.extui %0 : i1 to i32
    %c0_i32_0 = arith.constant 0 : i32
    %2 = arith.cmpi ne, %1, %c0_i32_0 : i32
    scf.if %2 {
      %c0_52 = arith.constant 0 : index
      %c0_53 = arith.constant 0 : index
      %c0_54 = arith.constant 0 : index
      %97 = vector.load %arg3[%c0_52, %c0_53, %c0_54] : memref<1x8x32xf32, #tpu.memory_space<vmem>>, vector<1x8x32xf32>
      %98 = vector.shape_cast %97 : vector<1x8x32xf32> to vector<8x32xf32>
      %c0_55 = arith.constant 0 : index
      %c0_56 = arith.constant 0 : index
      %c0_57 = arith.constant 0 : index
      %99 = vector.load %arg4[%c0_55, %c0_56, %c0_57] : memref<1x8x32xf32, #tpu.memory_space<vmem>>, vector<1x8x32xf32>
      %100 = vector.shape_cast %99 : vector<1x8x32xf32> to vector<8x32xf32>
      %c0_58 = arith.constant 0 : index
      %c0_59 = arith.constant 0 : index
      %101 = vector.load %arg7[%c0_58, %c0_59] : memref<32x64xf32, #tpu.memory_space<vmem>>, vector<32x64xf32>
      %cst_60 = arith.constant dense<0.000000e+00> : vector<8x64xf32>
      %102 = tpu.matmul %98, %101, %cst_60 {dimension_numbers = #tpu.dot_dimension_numbers<[1], [0], [0], [1], [0, 0, 1, 1], [], []>} : vector<8x32xf32>, vector<32x64xf32>, vector<8x64xf32> -> vector<8x64xf32>
      %c0_61 = arith.constant 0 : index
      %c0_62 = arith.constant 0 : index
      %103 = vector.load %arg8[%c0_61, %c0_62] : memref<1x64xf32, #tpu.memory_space<vmem>>, vector<1x64xf32>
      %104 = vector.broadcast %103 : vector<1x64xf32> to vector<8x64xf32>
      %105 = arith.addf %102, %104 : vector<8x64xf32>
      %c0_63 = arith.constant 0 : index
      %c0_64 = arith.constant 0 : index
      %106 = vector.load %arg9[%c0_63, %c0_64] : memref<32x64xf32, #tpu.memory_space<vmem>>, vector<32x64xf32>
      %cst_65 = arith.constant dense<0.000000e+00> : vector<8x64xf32>
      %107 = tpu.matmul %100, %106, %cst_65 {dimension_numbers = #tpu.dot_dimension_numbers<[1], [0], [0], [1], [0, 0, 1, 1], [], []>} : vector<8x32xf32>, vector<32x64xf32>, vector<8x64xf32> -> vector<8x64xf32>
      %c0_66 = arith.constant 0 : index
      %c0_67 = arith.constant 0 : index
      %108 = vector.load %arg10[%c0_66, %c0_67] : memref<1x64xf32, #tpu.memory_space<vmem>>, vector<1x64xf32>
      %109 = vector.broadcast %108 : vector<1x64xf32> to vector<8x64xf32>
      %110 = arith.addf %107, %109 : vector<8x64xf32>
      %c0_68 = arith.constant 0 : index
      %c0_69 = arith.constant 0 : index
      %111 = vector.load %arg15[%c0_68, %c0_69] : memref<8x64xf32, #tpu.memory_space<vmem>>, vector<8x64xf32>
      tpu.vector_store %arg15[%c0_68, %c0_69], %105 {strides = array<i32>} : memref<8x64xf32, #tpu.memory_space<vmem>>, vector<8x64xf32>,
      %c0_70 = arith.constant 0 : index
      %c0_71 = arith.constant 0 : index
      %112 = vector.load %arg16[%c0_70, %c0_71] : memref<8x64xf32, #tpu.memory_space<vmem>>, vector<8x64xf32>
      tpu.vector_store %arg16[%c0_70, %c0_71], %110 {strides = array<i32>} : memref<8x64xf32, #tpu.memory_space<vmem>>, vector<8x64xf32>,
    } else {
    }
    %c0 = arith.constant 0 : index
    %c0_1 = arith.constant 0 : index
    %c0_2 = arith.constant 0 : index
    %3 = vector.load %arg2[%c0, %c0_1, %c0_2] : memref<1x8x32xf32, #tpu.memory_space<vmem>>, vector<1x8x32xf32>
    %4 = vector.shape_cast %3 : vector<1x8x32xf32> to vector<8x32xf32>
    %c0_3 = arith.constant 0 : index
    %c0_4 = arith.constant 0 : index
    %5 = vector.load %arg5[%c0_3, %c0_4] : memref<32x64xf32, #tpu.memory_space<vmem>>, vector<32x64xf32>
    %cst = arith.constant dense<0.000000e+00> : vector<8x64xf32>
    %6 = tpu.matmul %4, %5, %cst {dimension_numbers = #tpu.dot_dimension_numbers<[1], [0], [0], [1], [0, 0, 1, 1], [], []>} : vector<8x32xf32>, vector<32x64xf32>, vector<8x64xf32> -> vector<8x64xf32>
    %c0_5 = arith.constant 0 : index
    %c0_6 = arith.constant 0 : index
    %7 = vector.load %arg6[%c0_5, %c0_6] : memref<1x64xf32, #tpu.memory_space<vmem>>, vector<1x64xf32>
    %8 = vector.broadcast %7 : vector<1x64xf32> to vector<8x64xf32>
    %9 = arith.addf %6, %8 : vector<8x64xf32>
    %c0_7 = arith.constant 0 : index
    %c0_8 = arith.constant 0 : index
    %10 = vector.load %arg15[%c0_7, %c0_8] : memref<8x64xf32, #tpu.memory_space<vmem>>, vector<8x64xf32>
    %c0_9 = arith.constant 0 : index
    %c0_10 = arith.constant 0 : index
    %11 = vector.load %arg16[%c0_9, %c0_10] : memref<8x64xf32, #tpu.memory_space<vmem>>, vector<8x64xf32>
    %12 = vector.extract_strided_slice %9 {offsets = [0, 0], sizes = [8, 16], strides = [1, 1]} : vector<8x64xf32> to vector<8x16xf32>
    %13 = vector.extract_strided_slice %10 {offsets = [0, 0], sizes = [8, 16], strides = [1, 1]} : vector<8x64xf32> to vector<8x16xf32>
    %14 = vector.extract_strided_slice %11 {offsets = [0, 0], sizes = [8, 16], strides = [1, 1]} : vector<8x64xf32> to vector<8x16xf32>
    %cst_11 = arith.constant dense<0.000000e+00> : vector<8x8xf32>
    %15 = tpu.matmul %12, %13, %cst_11 {dimension_numbers = #tpu.dot_dimension_numbers<[1], [1], [0], [0], [0, 0, 1, 0], [], []>} : vector<8x16xf32>, vector<8x16xf32>, vector<8x8xf32> -> vector<8x8xf32>
    %cst_12 = arith.constant dense<0xFF800000> : vector<8xf32>
    %16 = vector.multi_reduction <maximumf>, %15, %cst_12 [1] : vector<8x8xf32> to vector<8xf32>
    %17 = vector.shape_cast %16 : vector<8xf32> to vector<8x1xf32>
    %18 = vector.broadcast %17 : vector<8x1xf32> to vector<8x8xf32>
    %19 = arith.subf %15, %18 : vector<8x8xf32>
    %20 = math.exp %19 : vector<8x8xf32>
    %cst_13 = arith.constant dense<0.000000e+00> : vector<8xf32>
    %21 = vector.multi_reduction <add>, %20, %cst_13 [1] : vector<8x8xf32> to vector<8xf32>
    %22 = vector.shape_cast %21 : vector<8xf32> to vector<8x1xf32>
    %23 = tpu.reciprocal %22 {approx = true} : vector<8x1xf32> -> vector<8x1xf32>
    %24 = vector.broadcast %23 : vector<8x1xf32> to vector<8x8xf32>
    %25 = arith.mulf %20, %24 : vector<8x8xf32>
    %c0_14 = arith.constant 0 : index
    %c0_15 = arith.constant 0 : index
    %c0_16 = arith.constant 0 : index
    %26 = vector.load %arg14[%c0_14, %c0_15, %c0_16] : memref<1x8x32xf32, #tpu.memory_space<vmem>>, vector<1x8x8xf32>
    %27 = vector.shape_cast %26 : vector<1x8x8xf32> to vector<8x8xf32>
    %28 = vector.shape_cast %25 : vector<8x8xf32> to vector<1x8x8xf32>
    tpu.vector_store %arg14[%c0_14, %c0_15, %c0_16], %28 {strides = array<i32>} : memref<1x8x32xf32, #tpu.memory_space<vmem>>, vector<1x8x8xf32>,
    %cst_17 = arith.constant dense<0.000000e+00> : vector<8x16xf32>
    %29 = tpu.matmul %25, %14, %cst_17 {dimension_numbers = #tpu.dot_dimension_numbers<[1], [0], [0], [1], [0, 0, 1, 1], [], []>} : vector<8x8xf32>, vector<8x16xf32>, vector<8x16xf32> -> vector<8x16xf32>
    %c0_18 = arith.constant 0 : index
    %c0_19 = arith.constant 0 : index
    %30 = vector.load %arg17[%c0_18, %c0_19] : memref<8x64xf32, #tpu.memory_space<vmem>>, vector<8x16xf32>
    tpu.vector_store %arg17[%c0_18, %c0_19], %29 {strides = array<i32>} : memref<8x64xf32, #tpu.memory_space<vmem>>, vector<8x16xf32>,
    %31 = vector.extract_strided_slice %9 {offsets = [0, 16], sizes = [8, 16], strides = [1, 1]} : vector<8x64xf32> to vector<8x16xf32>
    %32 = vector.extract_strided_slice %10 {offsets = [0, 16], sizes = [8, 16], strides = [1, 1]} : vector<8x64xf32> to vector<8x16xf32>
    %33 = vector.extract_strided_slice %11 {offsets = [0, 16], sizes = [8, 16], strides = [1, 1]} : vector<8x64xf32> to vector<8x16xf32>
    %cst_20 = arith.constant dense<0.000000e+00> : vector<8x8xf32>
    %34 = tpu.matmul %31, %32, %cst_20 {dimension_numbers = #tpu.dot_dimension_numbers<[1], [1], [0], [0], [0, 0, 1, 0], [], []>} : vector<8x16xf32>, vector<8x16xf32>, vector<8x8xf32> -> vector<8x8xf32>
    %cst_21 = arith.constant dense<0xFF800000> : vector<8xf32>
    %35 = vector.multi_reduction <maximumf>, %34, %cst_21 [1] : vector<8x8xf32> to vector<8xf32>
    %36 = vector.shape_cast %35 : vector<8xf32> to vector<8x1xf32>
    %37 = vector.broadcast %36 : vector<8x1xf32> to vector<8x8xf32>
    %38 = arith.subf %34, %37 : vector<8x8xf32>
    %39 = math.exp %38 : vector<8x8xf32>
    %cst_22 = arith.constant dense<0.000000e+00> : vector<8xf32>
    %40 = vector.multi_reduction <add>, %39, %cst_22 [1] : vector<8x8xf32> to vector<8xf32>
    %41 = vector.shape_cast %40 : vector<8xf32> to vector<8x1xf32>
    %42 = tpu.reciprocal %41 {approx = true} : vector<8x1xf32> -> vector<8x1xf32>
    %43 = vector.broadcast %42 : vector<8x1xf32> to vector<8x8xf32>
    %44 = arith.mulf %39, %43 : vector<8x8xf32>
    %c0_23 = arith.constant 0 : index
    %c0_24 = arith.constant 0 : index
    %c8 = arith.constant 8 : index
    %45 = vector.load %arg14[%c0_23, %c0_24, %c8] : memref<1x8x32xf32, #tpu.memory_space<vmem>>, vector<1x8x8xf32>
    %46 = vector.shape_cast %45 : vector<1x8x8xf32> to vector<8x8xf32>
    %47 = vector.shape_cast %44 : vector<8x8xf32> to vector<1x8x8xf32>
    tpu.vector_store %arg14[%c0_23, %c0_24, %c8], %47 {strides = array<i32>} : memref<1x8x32xf32, #tpu.memory_space<vmem>>, vector<1x8x8xf32>,
    %cst_25 = arith.constant dense<0.000000e+00> : vector<8x16xf32>
    %48 = tpu.matmul %44, %33, %cst_25 {dimension_numbers = #tpu.dot_dimension_numbers<[1], [0], [0], [1], [0, 0, 1, 1], [], []>} : vector<8x8xf32>, vector<8x16xf32>, vector<8x16xf32> -> vector<8x16xf32>
    %c0_26 = arith.constant 0 : index
    %c16 = arith.constant 16 : index
    %49 = vector.load %arg17[%c0_26, %c16] : memref<8x64xf32, #tpu.memory_space<vmem>>, vector<8x16xf32>
    tpu.vector_store %arg17[%c0_26, %c16], %48 {strides = array<i32>} : memref<8x64xf32, #tpu.memory_space<vmem>>, vector<8x16xf32>,
    %50 = vector.extract_strided_slice %9 {offsets = [0, 32], sizes = [8, 16], strides = [1, 1]} : vector<8x64xf32> to vector<8x16xf32>
    %51 = vector.extract_strided_slice %10 {offsets = [0, 32], sizes = [8, 16], strides = [1, 1]} : vector<8x64xf32> to vector<8x16xf32>
    %52 = vector.extract_strided_slice %11 {offsets = [0, 32], sizes = [8, 16], strides = [1, 1]} : vector<8x64xf32> to vector<8x16xf32>
    %cst_27 = arith.constant dense<0.000000e+00> : vector<8x8xf32>
    %53 = tpu.matmul %50, %51, %cst_27 {dimension_numbers = #tpu.dot_dimension_numbers<[1], [1], [0], [0], [0, 0, 1, 0], [], []>} : vector<8x16xf32>, vector<8x16xf32>, vector<8x8xf32> -> vector<8x8xf32>
    %cst_28 = arith.constant dense<0xFF800000> : vector<8xf32>
    %54 = vector.multi_reduction <maximumf>, %53, %cst_28 [1] : vector<8x8xf32> to vector<8xf32>
    %55 = vector.shape_cast %54 : vector<8xf32> to vector<8x1xf32>
    %56 = vector.broadcast %55 : vector<8x1xf32> to vector<8x8xf32>
    %57 = arith.subf %53, %56 : vector<8x8xf32>
    %58 = math.exp %57 : vector<8x8xf32>
    %cst_29 = arith.constant dense<0.000000e+00> : vector<8xf32>
    %59 = vector.multi_reduction <add>, %58, %cst_29 [1] : vector<8x8xf32> to vector<8xf32>
    %60 = vector.shape_cast %59 : vector<8xf32> to vector<8x1xf32>
    %61 = tpu.reciprocal %60 {approx = true} : vector<8x1xf32> -> vector<8x1xf32>
    %62 = vector.broadcast %61 : vector<8x1xf32> to vector<8x8xf32>
    %63 = arith.mulf %58, %62 : vector<8x8xf32>
    %c0_30 = arith.constant 0 : index
    %c0_31 = arith.constant 0 : index
    %c16_32 = arith.constant 16 : index
    %64 = vector.load %arg14[%c0_30, %c0_31, %c16_32] : memref<1x8x32xf32, #tpu.memory_space<vmem>>, vector<1x8x8xf32>
    %65 = vector.shape_cast %64 : vector<1x8x8xf32> to vector<8x8xf32>
    %66 = vector.shape_cast %63 : vector<8x8xf32> to vector<1x8x8xf32>
    tpu.vector_store %arg14[%c0_30, %c0_31, %c16_32], %66 {strides = array<i32>} : memref<1x8x32xf32, #tpu.memory_space<vmem>>, vector<1x8x8xf32>,
    %cst_33 = arith.constant dense<0.000000e+00> : vector<8x16xf32>
    %67 = tpu.matmul %63, %52, %cst_33 {dimension_numbers = #tpu.dot_dimension_numbers<[1], [0], [0], [1], [0, 0, 1, 1], [], []>} : vector<8x8xf32>, vector<8x16xf32>, vector<8x16xf32> -> vector<8x16xf32>
    %c0_34 = arith.constant 0 : index
    %c32 = arith.constant 32 : index
    %68 = vector.load %arg17[%c0_34, %c32] : memref<8x64xf32, #tpu.memory_space<vmem>>, vector<8x16xf32>
    tpu.vector_store %arg17[%c0_34, %c32], %67 {strides = array<i32>} : memref<8x64xf32, #tpu.memory_space<vmem>>, vector<8x16xf32>,
    %69 = vector.extract_strided_slice %9 {offsets = [0, 48], sizes = [8, 16], strides = [1, 1]} : vector<8x64xf32> to vector<8x16xf32>
    %70 = vector.extract_strided_slice %10 {offsets = [0, 48], sizes = [8, 16], strides = [1, 1]} : vector<8x64xf32> to vector<8x16xf32>
    %71 = vector.extract_strided_slice %11 {offsets = [0, 48], sizes = [8, 16], strides = [1, 1]} : vector<8x64xf32> to vector<8x16xf32>
    %cst_35 = arith.constant dense<0.000000e+00> : vector<8x8xf32>
    %72 = tpu.matmul %69, %70, %cst_35 {dimension_numbers = #tpu.dot_dimension_numbers<[1], [1], [0], [0], [0, 0, 1, 0], [], []>} : vector<8x16xf32>, vector<8x16xf32>, vector<8x8xf32> -> vector<8x8xf32>
    %cst_36 = arith.constant dense<0xFF800000> : vector<8xf32>
    %73 = vector.multi_reduction <maximumf>, %72, %cst_36 [1] : vector<8x8xf32> to vector<8xf32>
    %74 = vector.shape_cast %73 : vector<8xf32> to vector<8x1xf32>
    %75 = vector.broadcast %74 : vector<8x1xf32> to vector<8x8xf32>
    %76 = arith.subf %72, %75 : vector<8x8xf32>
    %77 = math.exp %76 : vector<8x8xf32>
    %cst_37 = arith.constant dense<0.000000e+00> : vector<8xf32>
    %78 = vector.multi_reduction <add>, %77, %cst_37 [1] : vector<8x8xf32> to vector<8xf32>
    %79 = vector.shape_cast %78 : vector<8xf32> to vector<8x1xf32>
    %80 = tpu.reciprocal %79 {approx = true} : vector<8x1xf32> -> vector<8x1xf32>
    %81 = vector.broadcast %80 : vector<8x1xf32> to vector<8x8xf32>
    %82 = arith.mulf %77, %81 : vector<8x8xf32>
    %c0_38 = arith.constant 0 : index
    %c0_39 = arith.constant 0 : index
    %c24 = arith.constant 24 : index
    %83 = vector.load %arg14[%c0_38, %c0_39, %c24] : memref<1x8x32xf32, #tpu.memory_space<vmem>>, vector<1x8x8xf32>
    %84 = vector.shape_cast %83 : vector<1x8x8xf32> to vector<8x8xf32>
    %85 = vector.shape_cast %82 : vector<8x8xf32> to vector<1x8x8xf32>
    tpu.vector_store %arg14[%c0_38, %c0_39, %c24], %85 {strides = array<i32>} : memref<1x8x32xf32, #tpu.memory_space<vmem>>, vector<1x8x8xf32>,
    %cst_40 = arith.constant dense<0.000000e+00> : vector<8x16xf32>
    %86 = tpu.matmul %82, %71, %cst_40 {dimension_numbers = #tpu.dot_dimension_numbers<[1], [0], [0], [1], [0, 0, 1, 1], [], []>} : vector<8x8xf32>, vector<8x16xf32>, vector<8x16xf32> -> vector<8x16xf32>
    %c0_41 = arith.constant 0 : index
    %c48 = arith.constant 48 : index
    %87 = vector.load %arg17[%c0_41, %c48] : memref<8x64xf32, #tpu.memory_space<vmem>>, vector<8x16xf32>
    tpu.vector_store %arg17[%c0_41, %c48], %86 {strides = array<i32>} : memref<8x64xf32, #tpu.memory_space<vmem>>, vector<8x16xf32>,
    %c0_42 = arith.constant 0 : index
    %c0_43 = arith.constant 0 : index
    %88 = vector.load %arg17[%c0_42, %c0_43] : memref<8x64xf32, #tpu.memory_space<vmem>>, vector<8x64xf32>
    %c0_44 = arith.constant 0 : index
    %c0_45 = arith.constant 0 : index
    %89 = vector.load %arg11[%c0_44, %c0_45] : memref<64x32xf32, #tpu.memory_space<vmem>>, vector<64x32xf32>
    %cst_46 = arith.constant dense<0.000000e+00> : vector<8x32xf32>
    %90 = tpu.matmul %88, %89, %cst_46 {dimension_numbers = #tpu.dot_dimension_numbers<[1], [0], [0], [1], [0, 0, 1, 1], [], []>} : vector<8x64xf32>, vector<64x32xf32>, vector<8x32xf32> -> vector<8x32xf32>
    %c0_47 = arith.constant 0 : index
    %c0_48 = arith.constant 0 : index
    %91 = vector.load %arg12[%c0_47, %c0_48] : memref<1x32xf32, #tpu.memory_space<vmem>>, vector<1x32xf32>
    %92 = vector.broadcast %91 : vector<1x32xf32> to vector<8x32xf32>
    %93 = arith.addf %90, %92 : vector<8x32xf32>
    %c0_49 = arith.constant 0 : index
    %c0_50 = arith.constant 0 : index
    %c0_51 = arith.constant 0 : index
    %94 = vector.load %arg13[%c0_49, %c0_50, %c0_51] : memref<1x8x32xf32, #tpu.memory_space<vmem>>, vector<1x8x32xf32>
    %95 = vector.shape_cast %94 : vector<1x8x32xf32> to vector<8x32xf32>
    %96 = vector.shape_cast %93 : vector<8x32xf32> to vector<1x8x32xf32>
    tpu.vector_store %arg13[%c0_49, %c0_50, %c0_51], %96 {strides = array<i32>} : memref<1x8x32xf32, #tpu.memory_space<vmem>>, vector<1x8x32xf32>,
    return
  }
  func.func @transform_0(%arg0: i32, %arg1: i32) -> (i32, i32, i32) {
    %c0_i32 = arith.constant 0 : i32
    %c0_i32_0 = arith.constant 0 : i32
    return %arg0, %arg1, %c0_i32 : i32, i32, i32
  }
  func.func @transform_1(%arg0: i32, %arg1: i32) -> (i32, i32, i32) {
    %c0_i32 = arith.constant 0 : i32
    %c0_i32_0 = arith.constant 0 : i32
    %c0_i32_1 = arith.constant 0 : i32
    return %arg0, %c0_i32, %c0_i32_0 : i32, i32, i32
  }
  func.func @transform_2(%arg0: i32, %arg1: i32) -> (i32, i32, i32) {
    %c0_i32 = arith.constant 0 : i32
    %c0_i32_0 = arith.constant 0 : i32
    %c0_i32_1 = arith.constant 0 : i32
    return %arg0, %c0_i32, %c0_i32_0 : i32, i32, i32
  }
  func.func @transform_3(%arg0: i32, %arg1: i32) -> (i32, i32) {
    %c0_i32 = arith.constant 0 : i32
    %c0_i32_0 = arith.constant 0 : i32
    %c0_i32_1 = arith.constant 0 : i32
    return %c0_i32, %c0_i32_0 : i32, i32
  }
  func.func @transform_4(%arg0: i32, %arg1: i32) -> (i32, i32) {
    %c0_i32 = arith.constant 0 : i32
    %c0_i32_0 = arith.constant 0 : i32
    %c0_i32_1 = arith.constant 0 : i32
    return %c0_i32, %c0_i32_0 : i32, i32
  }
  func.func @transform_5(%arg0: i32, %arg1: i32) -> (i32, i32) {
    %c0_i32 = arith.constant 0 : i32
    %c0_i32_0 = arith.constant 0 : i32
    %c0_i32_1 = arith.constant 0 : i32
    return %c0_i32, %c0_i32_0 : i32, i32
  }
  func.func @transform_6(%arg0: i32, %arg1: i32) -> (i32, i32) {
    %c0_i32 = arith.constant 0 : i32
    %c0_i32_0 = arith.constant 0 : i32
    %c0_i32_1 = arith.constant 0 : i32
    return %c0_i32, %c0_i32_0 : i32, i32
  }
  func.func @transform_7(%arg0: i32, %arg1: i32) -> (i32, i32) {
    %c0_i32 = arith.constant 0 : i32
    %c0_i32_0 = arith.constant 0 : i32
    %c0_i32_1 = arith.constant 0 : i32
    return %c0_i32, %c0_i32_0 : i32, i32
  }
  func.func @transform_8(%arg0: i32, %arg1: i32) -> (i32, i32) {
    %c0_i32 = arith.constant 0 : i32
    %c0_i32_0 = arith.constant 0 : i32
    %c0_i32_1 = arith.constant 0 : i32
    return %c0_i32, %c0_i32_0 : i32, i32
  }
  func.func @transform_9(%arg0: i32, %arg1: i32) -> (i32, i32) {
    %c0_i32 = arith.constant 0 : i32
    %c0_i32_0 = arith.constant 0 : i32
    %c0_i32_1 = arith.constant 0 : i32
    return %c0_i32, %c0_i32_0 : i32, i32
  }
  func.func @transform_10(%arg0: i32, %arg1: i32) -> (i32, i32) {
    %c0_i32 = arith.constant 0 : i32
    %c0_i32_0 = arith.constant 0 : i32
    %c0_i32_1 = arith.constant 0 : i32
    return %c0_i32, %c0_i32_0 : i32, i32
  }
  func.func @transform_11(%arg0: i32, %arg1: i32) -> (i32, i32, i32) {
    %c0_i32 = arith.constant 0 : i32
    %c0_i32_0 = arith.constant 0 : i32
    return %arg0, %arg1, %c0_i32 : i32, i32, i32
  }
  func.func @transform_12(%arg0: i32, %arg1: i32) -> (i32, i32, i32) {
    %c0_i32 = arith.constant 0 : i32
    %c0_i32_0 = arith.constant 0 : i32
    return %arg0, %arg1, %c0_i32 : i32, i32, i32
  }
}

</mosaic_0001>

<llo_original>
// kernel: tpu_custom_call.1
$region0: #{tpu_custom_call.1}
  #allocation0 [shape = 'u32[]', space=smem, size = 0x4, offset = 0x4, fixed_abs, tag = 'smem constant byte address 0x4 - core index']
  #allocation1 [shape = 'u32[72,128]{1,0:T(1,128)}', space=vmem, size = 0x9000, scoped, tag = 'internal scratch']
  #allocation2 [shape = 'f32[8,64]{1,0:T(8,128)}', space=vmem, size = 0x1000, scoped, tag = 'scratch operand']
  #allocation3 [shape = 'f32[8,64]{1,0:T(8,128)}', space=vmem, size = 0x1000, scoped, tag = 'scratch operand']
  #allocation4 [shape = 'f32[8,64]{1,0:T(8,128)}', space=vmem, size = 0x1000, scoped, tag = 'scratch operand']
  %s0 = inlined_call_operand.hbm [shape: f32[2,8,32], index: 0, kind: input, shape index: {}]
  %s1 = inlined_call_operand.hbm [shape: f32[2,8,32], index: 1, kind: input, shape index: {}]
  %s2 = inlined_call_operand.hbm [shape: f32[2,8,32], index: 2, kind: input, shape index: {}]
  %s3 = inlined_call_operand.vmem [shape: f32[32,64], index: 3, kind: input, shape index: {}]
  %s4 = inlined_call_operand.vmem [shape: f32[1,64], index: 4, kind: input, shape index: {}]
  %s5 = inlined_call_operand.vmem [shape: f32[32,64], index: 5, kind: input, shape index: {}]
  %s6 = inlined_call_operand.vmem [shape: f32[1,64], index: 6, kind: input, shape index: {}]
  %s7 = inlined_call_operand.vmem [shape: f32[32,64], index: 7, kind: input, shape index: {}]
  %s8 = inlined_call_operand.vmem [shape: f32[1,64], index: 8, kind: input, shape index: {}]
  %s9 = inlined_call_operand.vmem [shape: f32[64,32], index: 9, kind: input, shape index: {}]
  %s10 = inlined_call_operand.vmem [shape: f32[1,32], index: 10, kind: input, shape index: {}]
  %s11 = inlined_call_operand.hbm [shape: f32[2,8,32], index: 11, kind: output, shape index: {0}]
  %s12 = inlined_call_operand.hbm [shape: f32[2,8,32], index: 12, kind: output, shape index: {1}]
  %13 = xla_tuple %s11, %s12
  %s14 = sld [smem:[#allocation0]]
  $region101: #{tpu_custom_call.1} parent=0
    _
  %s16 = ssub.s32 1, %s14
  %s17 = scalar_select 0, %s16, %s14
  $region1: #{tpu_custom_call.1} parent=0
    #allocation5 [shape = 'u8[8192]{0}', space=vmem, size = 0x2000, scoped, tag = 'input window, operand 0']
    #allocation6 [shape = 's32[2]{0}', space=sflag, size = 0x8, scoped, tag = 'scoped memory for tpu_custom_call.1']
    #allocation7 [shape = 's32[2]{0}', space=sflag, size = 0x8, scoped, tag = 'scoped memory for tpu_custom_call.1']
    #allocation8 [shape = 'u8[8192]{0}', space=vmem, size = 0x2000, scoped, tag = 'input window, operand 1']
    #allocation9 [shape = 's32[2]{0}', space=sflag, size = 0x8, scoped, tag = 'scoped memory for tpu_custom_call.1']
    #allocation10 [shape = 'u8[8192]{0}', space=vmem, size = 0x2000, scoped, tag = 'input window, operand 2']
    #allocation11 [shape = 'u8[8192]{0}', space=vmem, size = 0x2000, scoped, tag = 'output window, operand 0']
    #allocation12 [shape = 'u8[8192]{0}', space=vmem, size = 0x2000, scoped, tag = 'output window, operand 1']
    #allocation13 [shape = 's32[2]{0}', space=sflag, size = 0x8, scoped, tag = 'scoped memory for tpu_custom_call.1']
    %18 = vsyncpa [#allocation6], 0
    %s19 = scalar_lea.sflag [#allocation6], 1
    %20 = vsyncpa %s19, 0
    %21 = vsyncpa [#allocation9], 0
    %s22 = scalar_lea.sflag [#allocation9], 1
    %23 = vsyncpa %s22, 0
    %24 = vsyncpa [#allocation7], 0
    %s25 = scalar_lea.sflag [#allocation7], 1
    %26 = vsyncpa %s25, 0
    %27 = vsyncpa [#allocation13], 0
    %s28 = scalar_lea.sflag [#allocation13], 1
    %29 = vsyncpa %s28, 0
    loop: start=0, step=1, limit=4
    $region2: #{tpu_custom_call.1} parent=1 // loop_pre_header
      _
    $region3: #{tpu_custom_call.1} parent=1 // loop_header
      %s31 = sphi 0, %s35
      %p32 = scmp.ge.s32.totalorder %s31, 4
      %s38 = sphi 0, %s50
      %s39 = sphi 0, %s46
      %s40 = sphi 0, %s38
      %s41 = sphi 0, %s39
      %s42 = sphi 0, %s40
      %s43 = sphi 0, %s41
      %s55 = sphi 0, %s57
      %s58 = sphi 0, %s55
      %s59 = sphi 0, %s58
      %s75 = sphi 0, %s59
      %s81 = sphi 0, %s83
      %s84 = sphi 0, %s81
      %s85 = sphi 0, %s84
      %s101 = sphi 0, %s85
      %s107 = sphi 0, %s109
      %s110 = sphi 0, %s107
      %s111 = sphi 0, %s110
      %s127 = sphi 0, %s111
      %s131 = sphi 0, %s131
      %s133 = sphi 0, %s131
      %s134 = sphi 0, %s133
      %s148 = sphi 0, %s134
      %s152 = sphi 0, %s152
      %s154 = sphi 0, %s152
      %s155 = sphi 0, %s154
      %s169 = sphi 0, %s155
      %s173 = sphi 0, %s173
      %s175 = sphi 0, %s173
      %s176 = sphi 0, %s175
      %s190 = sphi 0, %s176
      %s194 = sphi 0, %s194
      %s196 = sphi 0, %s194
      %s197 = sphi 0, %s196
      %s211 = sphi 0, %s197
      %s215 = sphi 0, %s215
      %s217 = sphi 0, %s215
      %s218 = sphi 0, %s217
      %s232 = sphi 0, %s218
      %s236 = sphi 0, %s236
      %s238 = sphi 0, %s236
      %s239 = sphi 0, %s238
      %s253 = sphi 0, %s239
      %s257 = sphi 0, %s257
      %s259 = sphi 0, %s257
      %s260 = sphi 0, %s259
      %s274 = sphi 0, %s260
      %s278 = sphi 0, %s278
      %s280 = sphi 0, %s278
      %s281 = sphi 0, %s280
      %s295 = sphi 0, %s281
      %s303 = sphi 0, %s305
      %s306 = sphi 0, %s303
      %s307 = sphi 0, %s306
      %s323 = sphi 0, %s307
      %s331 = sphi 0, %s333
      %s334 = sphi 0, %s331
      %s335 = sphi 0, %s334
      %s351 = sphi 0, %s335
    $region4: #{tpu_custom_call.1} parent=1 // loop_header_branch
      %34 = sbr.rel (%p32) target = $region8
    $region5: #{tpu_custom_call.1} parent=1 // loop_body
      %s36 = ssub.s32 %s31, 1
      %s37 = ssub.s32 %s31, 2
      %s44 = sadd.s32 1, %s39
      %p45 = scmp.ge.s32.totalorder %s44, 1
      %s46 = scalar_select %p45, 0, %s44
      %s47 = sadd.s32 1, %s38
      %s48 = scalar_select %p45, %s47, %s38
      %p49 = scmp.ge.s32.totalorder %s48, 2
      %s50 = scalar_select %p49, 0, %s48
      %s51 = ssub.s32 %s38, %s50
      %s52 = ssub.s32 %s39, %s46
      %s53 = sor.u32 %s51, %s52
      %p54 = scmp.eq.s32.totalorder %s53, 0
      %s56 = sadd.s32 %s55, 1
      %s57 = scalar_select %p54, %s55, %s56
      %p60 = pneg %p54
      %p61 = scmp.eq.s32.totalorder %s31, 1
      %p62 = por %p60, %p61
      %p63 = scmp.ne.s32.totalorder %s55, %s58
      %p64 = scmp.eq.s32.totalorder %s31, 0
      %p65 = por %p63, %p64
      %p66 = scmp.ne.s32.totalorder %s55, %s58
      %p67 = scmp.eq.s32.totalorder %s36, 1
      %p68 = por %p66, %p67
      %p69 = scmp.ne.s32.totalorder %s58, %s59
      %p70 = scmp.eq.s32.totalorder %s36, 0
      %p71 = por %p69, %p70
      %p72 = scmp.ne.s32.totalorder %s58, %s59
      %p73 = scmp.eq.s32.totalorder %s37, 1
      %p74 = por %p72, %p73
      %p76 = scmp.ne.s32.totalorder %s59, %s75
      %p77 = scmp.eq.s32.totalorder %s37, 0
      %p78 = por %p76, %p77
      %s79 = ssub.s32 %s38, %s50
      %p80 = scmp.eq.s32.totalorder %s79, 0
      %s82 = sadd.s32 %s81, 1
      %s83 = scalar_select %p80, %s81, %s82
      %p86 = pneg %p80
      %p87 = scmp.eq.s32.totalorder %s31, 1
      %p88 = por %p86, %p87
      %p89 = scmp.ne.s32.totalorder %s81, %s84
      %p90 = scmp.eq.s32.totalorder %s31, 0
      %p91 = por %p89, %p90
      %p92 = scmp.ne.s32.totalorder %s81, %s84
      %p93 = scmp.eq.s32.totalorder %s36, 1
      %p94 = por %p92, %p93
      %p95 = scmp.ne.s32.totalorder %s84, %s85
      %p96 = scmp.eq.s32.totalorder %s36, 0
      %p97 = por %p95, %p96
      %p98 = scmp.ne.s32.totalorder %s84, %s85
      %p99 = scmp.eq.s32.totalorder %s37, 1
      %p100 = por %p98, %p99
      %p102 = scmp.ne.s32.totalorder %s85, %s101
      %p103 = scmp.eq.s32.totalorder %s37, 0
      %p104 = por %p102, %p103
      %s105 = ssub.s32 %s38, %s50
      %p106 = scmp.eq.s32.totalorder %s105, 0
      %s108 = sadd.s32 %s107, 1
      %s109 = scalar_select %p106, %s107, %s108
      %p112 = pneg %p106
      %p113 = scmp.eq.s32.totalorder %s31, 1
      %p114 = por %p112, %p113
      %p115 = scmp.ne.s32.totalorder %s107, %s110
      %p116 = scmp.eq.s32.totalorder %s31, 0
      %p117 = por %p115, %p116
      %p118 = scmp.ne.s32.totalorder %s107, %s110
      %p119 = scmp.eq.s32.totalorder %s36, 1
      %p120 = por %p118, %p119
      %p121 = scmp.ne.s32.totalorder %s110, %s111
      %p122 = scmp.eq.s32.totalorder %s36, 0
      %p123 = por %p121, %p122
      %p124 = scmp.ne.s32.totalorder %s110, %s111
      %p125 = scmp.eq.s32.totalorder %s37, 1
      %p126 = por %p124, %p125
      %p128 = scmp.ne.s32.totalorder %s111, %s127
      %p129 = scmp.eq.s32.totalorder %s37, 0
      %p130 = por %p128, %p129
      %s132 = sadd.s32 %s131, 1
      %p135 = scmp.eq.s32.totalorder %s31, 1
      %p136 = scmp.ne.s32.totalorder %s131, %s133
      %p137 = scmp.eq.s32.totalorder %s31, 0
      %p138 = por %p136, %p137
      %p139 = scmp.ne.s32.totalorder %s131, %s133
      %p140 = scmp.eq.s32.totalorder %s36, 1
      %p141 = por %p139, %p140
      %p142 = scmp.ne.s32.totalorder %s133, %s134
      %p143 = scmp.eq.s32.totalorder %s36, 0
      %p144 = por %p142, %p143
      %p145 = scmp.ne.s32.totalorder %s133, %s134
      %p146 = scmp.eq.s32.totalorder %s37, 1
      %p147 = por %p145, %p146
      %p149 = scmp.ne.s32.totalorder %s134, %s148
      %p150 = scmp.eq.s32.totalorder %s37, 0
      %p151 = por %p149, %p150
      %s153 = sadd.s32 %s152, 1
      %p156 = scmp.eq.s32.totalorder %s31, 1
      %p157 = scmp.ne.s32.totalorder %s152, %s154
      %p158 = scmp.eq.s32.totalorder %s31, 0
      %p159 = por %p157, %p158
      %p160 = scmp.ne.s32.totalorder %s152, %s154
      %p161 = scmp.eq.s32.totalorder %s36, 1
      %p162 = por %p160, %p161
      %p163 = scmp.ne.s32.totalorder %s154, %s155
      %p164 = scmp.eq.s32.totalorder %s36, 0
      %p165 = por %p163, %p164
      %p166 = scmp.ne.s32.totalorder %s154, %s155
      %p167 = scmp.eq.s32.totalorder %s37, 1
      %p168 = por %p166, %p167
      %p170 = scmp.ne.s32.totalorder %s155, %s169
      %p171 = scmp.eq.s32.totalorder %s37, 0
      %p172 = por %p170, %p171
      %s174 = sadd.s32 %s173, 1
      %p177 = scmp.eq.s32.totalorder %s31, 1
      %p178 = scmp.ne.s32.totalorder %s173, %s175
      %p179 = scmp.eq.s32.totalorder %s31, 0
      %p180 = por %p178, %p179
      %p181 = scmp.ne.s32.totalorder %s173, %s175
      %p182 = scmp.eq.s32.totalorder %s36, 1
      %p183 = por %p181, %p182
      %p184 = scmp.ne.s32.totalorder %s175, %s176
      %p185 = scmp.eq.s32.totalorder %s36, 0
      %p186 = por %p184, %p185
      %p187 = scmp.ne.s32.totalorder %s175, %s176
      %p188 = scmp.eq.s32.totalorder %s37, 1
      %p189 = por %p187, %p188
      %p191 = scmp.ne.s32.totalorder %s176, %s190
      %p192 = scmp.eq.s32.totalorder %s37, 0
      %p193 = por %p191, %p192
      %s195 = sadd.s32 %s194, 1
      %p198 = scmp.eq.s32.totalorder %s31, 1
      %p199 = scmp.ne.s32.totalorder %s194, %s196
      %p200 = scmp.eq.s32.totalorder %s31, 0
      %p201 = por %p199, %p200
      %p202 = scmp.ne.s32.totalorder %s194, %s196
      %p203 = scmp.eq.s32.totalorder %s36, 1
      %p204 = por %p202, %p203
      %p205 = scmp.ne.s32.totalorder %s196, %s197
      %p206 = scmp.eq.s32.totalorder %s36, 0
      %p207 = por %p205, %p206
      %p208 = scmp.ne.s32.totalorder %s196, %s197
      %p209 = scmp.eq.s32.totalorder %s37, 1
      %p210 = por %p208, %p209
      %p212 = scmp.ne.s32.totalorder %s197, %s211
      %p213 = scmp.eq.s32.totalorder %s37, 0
      %p214 = por %p212, %p213
      %s216 = sadd.s32 %s215, 1
      %p219 = scmp.eq.s32.totalorder %s31, 1
      %p220 = scmp.ne.s32.totalorder %s215, %s217
      %p221 = scmp.eq.s32.totalorder %s31, 0
      %p222 = por %p220, %p221
      %p223 = scmp.ne.s32.totalorder %s215, %s217
      %p224 = scmp.eq.s32.totalorder %s36, 1
      %p225 = por %p223, %p224
      %p226 = scmp.ne.s32.totalorder %s217, %s218
      %p227 = scmp.eq.s32.totalorder %s36, 0
      %p228 = por %p226, %p227
      %p229 = scmp.ne.s32.totalorder %s217, %s218
      %p230 = scmp.eq.s32.totalorder %s37, 1
      %p231 = por %p229, %p230
      %p233 = scmp.ne.s32.totalorder %s218, %s232
      %p234 = scmp.eq.s32.totalorder %s37, 0
      %p235 = por %p233, %p234
      %s237 = sadd.s32 %s236, 1
      %p240 = scmp.eq.s32.totalorder %s31, 1
      %p241 = scmp.ne.s32.totalorder %s236, %s238
      %p242 = scmp.eq.s32.totalorder %s31, 0
      %p243 = por %p241, %p242
      %p244 = scmp.ne.s32.totalorder %s236, %s238
      %p245 = scmp.eq.s32.totalorder %s36, 1
      %p246 = por %p244, %p245
      %p247 = scmp.ne.s32.totalorder %s238, %s239
      %p248 = scmp.eq.s32.totalorder %s36, 0
      %p249 = por %p247, %p248
      %p250 = scmp.ne.s32.totalorder %s238, %s239
      %p251 = scmp.eq.s32.totalorder %s37, 1
      %p252 = por %p250, %p251
      %p254 = scmp.ne.s32.totalorder %s239, %s253
      %p255 = scmp.eq.s32.totalorder %s37, 0
      %p256 = por %p254, %p255
      %s258 = sadd.s32 %s257, 1
      %p261 = scmp.eq.s32.totalorder %s31, 1
      %p262 = scmp.ne.s32.totalorder %s257, %s259
      %p263 = scmp.eq.s32.totalorder %s31, 0
      %p264 = por %p262, %p263
      %p265 = scmp.ne.s32.totalorder %s257, %s259
      %p266 = scmp.eq.s32.totalorder %s36, 1
      %p267 = por %p265, %p266
      %p268 = scmp.ne.s32.totalorder %s259, %s260
      %p269 = scmp.eq.s32.totalorder %s36, 0
      %p270 = por %p268, %p269
      %p271 = scmp.ne.s32.totalorder %s259, %s260
      %p272 = scmp.eq.s32.totalorder %s37, 1
      %p273 = por %p271, %p272
      %p275 = scmp.ne.s32.totalorder %s260, %s274
      %p276 = scmp.eq.s32.totalorder %s37, 0
      %p277 = por %p275, %p276
      %s279 = sadd.s32 %s278, 1
      %p282 = scmp.eq.s32.totalorder %s31, 1
      %p283 = scmp.ne.s32.totalorder %s278, %s280
      %p284 = scmp.eq.s32.totalorder %s31, 0
      %p285 = por %p283, %p284
      %p286 = scmp.ne.s32.totalorder %s278, %s280
      %p287 = scmp.eq.s32.totalorder %s36, 1
      %p288 = por %p286, %p287
      %p289 = scmp.ne.s32.totalorder %s280, %s281
      %p290 = scmp.eq.s32.totalorder %s36, 0
      %p291 = por %p289, %p290
      %p292 = scmp.ne.s32.totalorder %s280, %s281
      %p293 = scmp.eq.s32.totalorder %s37, 1
      %p294 = por %p292, %p293
      %p296 = scmp.ne.s32.totalorder %s281, %s295
      %p297 = scmp.eq.s32.totalorder %s37, 0
      %p298 = por %p296, %p297
      %s299 = ssub.s32 %s38, %s50
      %s300 = ssub.s32 %s39, %s46
      %s301 = sor.u32 %s299, %s300
      %p302 = scmp.eq.s32.totalorder %s301, 0
      %s304 = sadd.s32 %s303, 1
      %s305 = scalar_select %p302, %s303, %s304
      %p308 = pneg %p302
      %p309 = scmp.eq.s32.totalorder %s31, 1
      %p310 = por %p308, %p309
      %p311 = scmp.ne.s32.totalorder %s303, %s306
      %p312 = scmp.eq.s32.totalorder %s31, 0
      %p313 = por %p311, %p312
      %p314 = scmp.ne.s32.totalorder %s303, %s306
      %p315 = scmp.eq.s32.totalorder %s36, 1
      %p316 = por %p314, %p315
      %p317 = scmp.ne.s32.totalorder %s306, %s307
      %p318 = scmp.eq.s32.totalorder %s36, 0
      %p319 = por %p317, %p318
      %p320 = scmp.ne.s32.totalorder %s306, %s307
      %p321 = scmp.eq.s32.totalorder %s37, 1
      %p322 = por %p320, %p321
      %p324 = scmp.ne.s32.totalorder %s307, %s323
      %p325 = scmp.eq.s32.totalorder %s37, 0
      %p326 = por %p324, %p325
      %s327 = ssub.s32 %s38, %s50
      %s328 = ssub.s32 %s39, %s46
      %s329 = sor.u32 %s327, %s328
      %p330 = scmp.eq.s32.totalorder %s329, 0
      %s332 = sadd.s32 %s331, 1
      %s333 = scalar_select %p330, %s331, %s332
      %p336 = pneg %p330
      %p337 = scmp.eq.s32.totalorder %s31, 1
      %p338 = por %p336, %p337
      %p339 = scmp.ne.s32.totalorder %s331, %s334
      %p340 = scmp.eq.s32.totalorder %s31, 0
      %p341 = por %p339, %p340
      %p342 = scmp.ne.s32.totalorder %s331, %s334
      %p343 = scmp.eq.s32.totalorder %s36, 1
      %p344 = por %p342, %p343
      %p345 = scmp.ne.s32.totalorder %s334, %s335
      %p346 = scmp.eq.s32.totalorder %s36, 0
      %p347 = por %p345, %p346
      %p348 = scmp.ne.s32.totalorder %s334, %s335
      %p349 = scmp.eq.s32.totalorder %s37, 1
      %p350 = por %p348, %p349
      %p352 = scmp.ne.s32.totalorder %s335, %s351
      %p353 = scmp.eq.s32.totalorder %s37, 0
      %p354 = por %p352, %p353
      %p355 = scmp.le.s32.totalorder 1, %s31
      %p356 = scmp.lt.s32.totalorder %s31, 3
      %p357 = pnand %p355, %p356
      %p358 = pneg %p357
      // Predicated region
      $region9: #{tpu_custom_call.1} parent=5 // pred_check
        _
      $region10: #{tpu_custom_call.1} parent=5 // pred_check_branch
        %360 = sbr.rel (%p357) target = $region12
      $region11: #{tpu_custom_call.1} parent=5 // pred_region
        %s361 = ssub.s32 %s31, 1
        // Predicated region
        $region13: #{tpu_custom_call.1} parent=11 // pred_check
          %p362 = pneg %p144
        $region14: #{tpu_custom_call.1} parent=11 // pred_check_branch
          %364 = sbr.rel (%p362) target = $region16
        $region15: #{tpu_custom_call.1} parent=11 // pred_region
          _
        $region16: #{tpu_custom_call.1} parent=11 // pred_fallthru
          _
        // Predicated region
        $region17: #{tpu_custom_call.1} parent=11 // pred_check
          %p365 = pneg %p165
        $region18: #{tpu_custom_call.1} parent=11 // pred_check_branch
          %367 = sbr.rel (%p365) target = $region20
        $region19: #{tpu_custom_call.1} parent=11 // pred_region
          _
        $region20: #{tpu_custom_call.1} parent=11 // pred_fallthru
          _
        // Predicated region
        $region21: #{tpu_custom_call.1} parent=11 // pred_check
          %p368 = pneg %p186
        $region22: #{tpu_custom_call.1} parent=11 // pred_check_branch
          %370 = sbr.rel (%p368) target = $region24
        $region23: #{tpu_custom_call.1} parent=11 // pred_region
          _
        $region24: #{tpu_custom_call.1} parent=11 // pred_fallthru
          _
        // Predicated region
        $region25: #{tpu_custom_call.1} parent=11 // pred_check
          %p371 = pneg %p207
        $region26: #{tpu_custom_call.1} parent=11 // pred_check_branch
          %373 = sbr.rel (%p371) target = $region28
        $region27: #{tpu_custom_call.1} parent=11 // pred_region
          _
        $region28: #{tpu_custom_call.1} parent=11 // pred_fallthru
          _
        // Predicated region
        $region29: #{tpu_custom_call.1} parent=11 // pred_check
          %p374 = pneg %p228
        $region30: #{tpu_custom_call.1} parent=11 // pred_check_branch
          %376 = sbr.rel (%p374) target = $region32
        $region31: #{tpu_custom_call.1} parent=11 // pred_region
          _
        $region32: #{tpu_custom_call.1} parent=11 // pred_fallthru
          _
        // Predicated region
        $region33: #{tpu_custom_call.1} parent=11 // pred_check
          %p377 = pneg %p249
        $region34: #{tpu_custom_call.1} parent=11 // pred_check_branch
          %379 = sbr.rel (%p377) target = $region36
        $region35: #{tpu_custom_call.1} parent=11 // pred_region
          _
        $region36: #{tpu_custom_call.1} parent=11 // pred_fallthru
          _
        // Predicated region
        $region37: #{tpu_custom_call.1} parent=11 // pred_check
          %p380 = pneg %p270
        $region38: #{tpu_custom_call.1} parent=11 // pred_check_branch
          %382 = sbr.rel (%p380) target = $region40
        $region39: #{tpu_custom_call.1} parent=11 // pred_region
          _
        $region40: #{tpu_custom_call.1} parent=11 // pred_fallthru
          _
        // Predicated region
        $region41: #{tpu_custom_call.1} parent=11 // pred_check
          %p383 = pneg %p291
        $region42: #{tpu_custom_call.1} parent=11 // pred_check_branch
          %385 = sbr.rel (%p383) target = $region44
        $region43: #{tpu_custom_call.1} parent=11 // pred_region
          _
        $region44: #{tpu_custom_call.1} parent=11 // pred_fallthru
          _
      $region12: #{tpu_custom_call.1} parent=5 // pred_fallthru
        _
      %p386 = scmp.lt.s32.totalorder %s31, 2
      // Predicated region
      $region45: #{tpu_custom_call.1} parent=5 // pred_check
        %p387 = pneg %p386
      $region46: #{tpu_custom_call.1} parent=5 // pred_check_branch
        %389 = sbr.rel (%p387) target = $region48
      $region47: #{tpu_custom_call.1} parent=5 // pred_region
        // Predicated region
        $region49: #{tpu_custom_call.1} parent=47 // pred_check
          %p390 = pneg %p65
        $region50: #{tpu_custom_call.1} parent=47 // pred_check_branch
          %392 = sbr.rel (%p390) target = $region52
        $region51: #{tpu_custom_call.1} parent=47 // pred_region
          %s393 = sand.u32 %s55, 1
          %s394 = scalar_lea.sflag [#allocation6], %s393
          %s395 = sand.u32 %s55, 1
          %s396 = smul.addr %s395, 8
          %s397 = scalar_lea.vmem [#allocation5], %s396
          %399 = vsyncadd %s394, 0
          %s400 = sadd.s32 %s39, %s38
          %s401 = smul.addr %s400, 8
          %s402 = scalar_lea.hbm %s0, %s401
          %s404 = sshll.u32 %s402, 4
          %s405 = int_to_ptr.hbm [resolvable:$true] %s404
          %s406 = sshll.u32 %s397, 4
          %s407 = int_to_ptr.vmem [resolvable:$true] %s406
          %409 = dma.hbm_to_vmem [thread:$0]  %s405, 128, %s407, %s394
        $region52: #{tpu_custom_call.1} parent=47 // pred_fallthru
          _
        // Predicated region
        $region53: #{tpu_custom_call.1} parent=47 // pred_check
          %p410 = pneg %p91
        $region54: #{tpu_custom_call.1} parent=47 // pred_check_branch
          %412 = sbr.rel (%p410) target = $region56
        $region55: #{tpu_custom_call.1} parent=47 // pred_region
          %s413 = sand.u32 %s31, 1
          %s414 = scalar_lea.sflag [#allocation9], %s413
          %s415 = sand.u32 %s81, 1
          %s416 = smul.addr %s415, 8
          %s417 = scalar_lea.vmem [#allocation8], %s416
          %419 = vsyncadd %s414, 0
          %s420 = smul.addr %s38, 8
          %s421 = scalar_lea.hbm %s1, %s420
          %s423 = sshll.u32 %s421, 4
          %s424 = int_to_ptr.hbm [resolvable:$true] %s423
          %s425 = sshll.u32 %s417, 4
          %s426 = int_to_ptr.vmem [resolvable:$true] %s425
          %428 = dma.hbm_to_vmem [thread:$0]  %s424, 128, %s426, %s414
        $region56: #{tpu_custom_call.1} parent=47 // pred_fallthru
          _
        // Predicated region
        $region57: #{tpu_custom_call.1} parent=47 // pred_check
          %p429 = pneg %p117
        $region58: #{tpu_custom_call.1} parent=47 // pred_check_branch
          %431 = sbr.rel (%p429) target = $region60
        $region59: #{tpu_custom_call.1} parent=47 // pred_region
          %s432 = sand.u32 %s31, 1
          %s433 = scalar_lea.sflag [#allocation9], %s432
          %s434 = sand.u32 %s107, 1
          %s435 = smul.addr %s434, 8
          %s436 = scalar_lea.vmem [#allocation10], %s435
          %438 = vsyncadd %s433, 0
          %s439 = smul.addr %s38, 8
          %s440 = scalar_lea.hbm %s2, %s439
          %s442 = sshll.u32 %s440, 4
          %s443 = int_to_ptr.hbm [resolvable:$true] %s442
          %s444 = sshll.u32 %s436, 4
          %s445 = int_to_ptr.vmem [resolvable:$true] %s444
          %447 = dma.hbm_to_vmem [thread:$0]  %s443, 128, %s445, %s433
        $region60: #{tpu_custom_call.1} parent=47 // pred_fallthru
          _
      $region48: #{tpu_custom_call.1} parent=5 // pred_fallthru
        _
      %p448 = scmp.le.s32.totalorder 1, %s31
      %p449 = scmp.lt.s32.totalorder %s31, 3
      %p450 = pnand %p448, %p449
      %p451 = pneg %p450
      // Predicated region
      $region61: #{tpu_custom_call.1} parent=5 // pred_check
        _
      $region62: #{tpu_custom_call.1} parent=5 // pred_check_branch
        %453 = sbr.rel (%p450) target = $region64
      $region63: #{tpu_custom_call.1} parent=5 // pred_region
        %s454 = ssub.s32 %s31, 1
        %s455 = sand.u32 %s58, 1
        %s456 = scalar_lea.sflag [#allocation6], %s455
        %s457 = sand.u32 %s58, 1
        %s458 = smul.addr %s457, 8
        %s459 = scalar_lea.vmem [#allocation5], %s458
        // Predicated region
        $region65: #{tpu_custom_call.1} parent=63 // pred_check
          %p460 = pneg %p71
        $region66: #{tpu_custom_call.1} parent=63 // pred_check_branch
          %462 = sbr.rel (%p460) target = $region68
        $region67: #{tpu_custom_call.1} parent=63 // pred_region
          %464 = dma.done %s456, 128
        $region68: #{tpu_custom_call.1} parent=63 // pred_fallthru
          _
        %s465 = sand.u32 %s36, 1
        %s466 = scalar_lea.sflag [#allocation9], %s465
        %s467 = sand.u32 %s84, 1
        %s468 = smul.addr %s467, 8
        %s469 = scalar_lea.vmem [#allocation8], %s468
        // Predicated region
        $region69: #{tpu_custom_call.1} parent=63 // pred_check
          %p470 = pneg %p97
        $region70: #{tpu_custom_call.1} parent=63 // pred_check_branch
          %472 = sbr.rel (%p470) target = $region72
        $region71: #{tpu_custom_call.1} parent=63 // pred_region
          %474 = dma.done %s466, 128
        $region72: #{tpu_custom_call.1} parent=63 // pred_fallthru
          _
        %s475 = sand.u32 %s36, 1
        %s476 = scalar_lea.sflag [#allocation9], %s475
        %s477 = sand.u32 %s110, 1
        %s478 = smul.addr %s477, 8
        %s479 = scalar_lea.vmem [#allocation10], %s478
        // Predicated region
        $region73: #{tpu_custom_call.1} parent=63 // pred_check
          %p480 = pneg %p123
        $region74: #{tpu_custom_call.1} parent=63 // pred_check_branch
          %482 = sbr.rel (%p480) target = $region76
        $region75: #{tpu_custom_call.1} parent=63 // pred_region
          %484 = dma.done %s476, 128
        $region76: #{tpu_custom_call.1} parent=63 // pred_fallthru
          _
        %s485 = sand.u32 %s58, 1
        %s486 = scalar_lea.sflag [#allocation6], %s485
        %s487 = sand.u32 %s58, 1
        %s488 = smul.addr %s487, 8
        %s489 = scalar_lea.vmem [#allocation5], %s488
        %p490 = pneg %p71
        %p491 = pneg %p68
        %s492 = sand.u32 %s36, 1
        %s493 = scalar_lea.sflag [#allocation9], %s492
        %s494 = sand.u32 %s84, 1
        %s495 = smul.addr %s494, 8
        %s496 = scalar_lea.vmem [#allocation8], %s495
        %p497 = pneg %p97
        %p498 = pneg %p94
        %s499 = sand.u32 %s36, 1
        %s500 = scalar_lea.sflag [#allocation9], %s499
        %s501 = sand.u32 %s110, 1
        %s502 = smul.addr %s501, 8
        %s503 = scalar_lea.vmem [#allocation10], %s502
        %p504 = pneg %p123
        %p505 = pneg %p120
        %p506 = pneg %p144
        %p507 = pneg %p141
        %p508 = pneg %p165
        %p509 = pneg %p162
        %p510 = pneg %p186
        %p511 = pneg %p183
        %p512 = pneg %p207
        %p513 = pneg %p204
        %p514 = pneg %p228
        %p515 = pneg %p225
        %p516 = pneg %p249
        %p517 = pneg %p246
        %p518 = pneg %p270
        %p519 = pneg %p267
        %p520 = pneg %p291
        %p521 = pneg %p288
        %p522 = pneg %p319
        %p523 = pneg %p316
        %s524 = sand.u32 %s306, 1
        %s525 = scalar_lea.sflag [#allocation7], %s524
        %s526 = sand.u32 %s306, 1
        %s527 = smul.addr %s526, 8
        %s528 = scalar_lea.vmem [#allocation11], %s527
        %p529 = pneg %p347
        %p530 = pneg %p344
        %s531 = sand.u32 %s334, 1
        %s532 = scalar_lea.sflag [#allocation13], %s531
        %s533 = sand.u32 %s334, 1
        %s534 = smul.addr %s533, 8
        %s535 = scalar_lea.vmem [#allocation12], %s534
        %p536 = scmp.eq.s32.totalorder %s41, 0
        // Predicated region
        $region77: #{tpu_custom_call.1} parent=63 // pred_check
          %p537 = pneg %p536
        $region78: #{tpu_custom_call.1} parent=63 // pred_check_branch
          %539 = sbr.rel (%p537) target = $region80
        $region79: #{tpu_custom_call.1} parent=63 // pred_region
          %v540 = vld [vmem:[%s469] sm:$0xff]
          %v541 = vld [vmem:[%s479] sm:$0xff]
          %v542 = vld [vmem:[%s5] sm:$0xff]
          %v543 = vld [vmem:[%s5 + $0x8] sm:$0xff]
          %v544 = vld [vmem:[%s5 + $0x10] sm:$0xff]
          %v545 = vld [vmem:[%s5 + $0x18] sm:$0xff]
          %v546 = vld [vmem:[%s6] sm:$0x1]
          %v548 = vperm.slane %v546, 0
          %vm550 = vcmask 261120
          %v552 = vsel %vm550, %v540, 0
          %554 = vmatpush.msra.mxu0 0.0
          %555 = vmatpush.msra.mxu0 0.0
          %556 = vmatpush.msra.mxu0 0.0
          %557 = vmatpush.msra.mxu0 0.0
          %558 = vmatpush.msra.mxu0 0.0
          %559 = vmatpush.msra.mxu0 0.0
          %560 = vmatpush.msra.mxu0 0.0
          %561 = vmatpush.msra.mxu0 0.0
          %562 = vmatpush.msra.mxu0 0.0
          %563 = vmatpush.msra.mxu0 0.0
          %564 = vmatpush.msra.mxu0 0.0
          %565 = vmatpush.msra.mxu0 0.0
          %566 = vmatpush.msra.mxu0 %v545
          %567 = vmatpush.msra.mxu0 %v544
          %568 = vmatpush.msra.mxu0 %v543
          %569 = vmatpush.msra.mxu0 %v542
          %570 = vmatmul.f32.gmra.mxu0 %v552
          %v571 = vpop.f32.mrf.mxu0
          %v572 = vadd.f32 %v548, %v571
          %573 = vdwg.mxu0
          %v574 = vld [vmem:[%s7] sm:$0xff]
          %v575 = vld [vmem:[%s7 + $0x8] sm:$0xff]
          %v576 = vld [vmem:[%s7 + $0x10] sm:$0xff]
          %v577 = vld [vmem:[%s7 + $0x18] sm:$0xff]
          %v578 = vld [vmem:[%s8] sm:$0x1]
          %v580 = vperm.slane %v578, 0
          %v583 = vsel %vm550, %v541, 0
          %585 = vmatpush.msra.mxu0 0.0
          %586 = vmatpush.msra.mxu0 0.0
          %587 = vmatpush.msra.mxu0 0.0
          %588 = vmatpush.msra.mxu0 0.0
          %589 = vmatpush.msra.mxu0 0.0
          %590 = vmatpush.msra.mxu0 0.0
          %591 = vmatpush.msra.mxu0 0.0
          %592 = vmatpush.msra.mxu0 0.0
          %593 = vmatpush.msra.mxu0 0.0
          %594 = vmatpush.msra.mxu0 0.0
          %595 = vmatpush.msra.mxu0 0.0
          %596 = vmatpush.msra.mxu0 0.0
          %597 = vmatpush.msra.mxu0 %v577
          %598 = vmatpush.msra.mxu0 %v576
          %599 = vmatpush.msra.mxu0 %v575
          %600 = vmatpush.msra.mxu0 %v574
          %601 = vmatmul.f32.gmra.mxu0 %v583
          %v602 = vpop.f32.mrf.mxu0
          %v603 = vadd.f32 %v580, %v602
          %604 = vdwg.mxu0
          %vm605 = vcmask 523264
          %606 = vst.msk [vmem:[#allocation2] sm:$0xff] %vm605, %v572
          %607 = vst.msk [vmem:[#allocation3] sm:$0xff] %vm605, %v603
        $region80: #{tpu_custom_call.1} parent=63 // pred_fallthru
          _
        %v608 = vld [vmem:[%s459] sm:$0xff]
        %v609 = vld [vmem:[%s3] sm:$0xff]
        %v610 = vld [vmem:[%s3 + $0x8] sm:$0xff]
        %v611 = vld [vmem:[%s3 + $0x10] sm:$0xff]
        %v612 = vld [vmem:[%s3 + $0x18] sm:$0xff]
        %v613 = vld [vmem:[%s4] sm:$0x1]
        %v615 = vperm.slane %v613, 0
        %vm617 = vcmask 261120
        %v619 = vsel %vm617, %v608, 0
        %621 = vmatpush.msra.mxu0 0.0
        %622 = vmatpush.msra.mxu0 0.0
        %623 = vmatpush.msra.mxu0 0.0
        %624 = vmatpush.msra.mxu0 0.0
        %625 = vmatpush.msra.mxu0 0.0
        %626 = vmatpush.msra.mxu0 0.0
        %627 = vmatpush.msra.mxu0 0.0
        %628 = vmatpush.msra.mxu0 0.0
        %629 = vmatpush.msra.mxu0 0.0
        %630 = vmatpush.msra.mxu0 0.0
        %631 = vmatpush.msra.mxu0 0.0
        %632 = vmatpush.msra.mxu0 0.0
        %633 = vmatpush.msra.mxu0 %v612
        %634 = vmatpush.msra.mxu0 %v611
        %635 = vmatpush.msra.mxu0 %v610
        %636 = vmatpush.msra.mxu0 %v609
        %637 = vmatmul.f32.gmra.mxu0 %v619
        %v638 = vpop.f32.mrf.mxu0
        %v639 = vadd.f32 %v615, %v638
        %640 = vdwg.mxu0
        %v641 = vld [vmem:[#allocation2] sm:$0xff]
        %v642 = vld [vmem:[#allocation3] sm:$0xff]
        %vm643 = vcmask 130048
        %v645 = vsel %vm643, %v639, 0
        %v648 = vsel %vm643, %v641, 0
        %650 = vmatpush.xpose.msra.mxu0 0.0
        %651 = vmatpush.xpose.msra.mxu0 0.0
        %652 = vmatpush.xpose.msra.mxu0 0.0
        %653 = vmatpush.xpose.msra.mxu0 0.0
        %654 = vmatpush.xpose.msra.mxu0 0.0
        %655 = vmatpush.xpose.msra.mxu0 0.0
        %656 = vmatpush.xpose.msra.mxu0 0.0
        %657 = vmatpush.xpose.msra.mxu0 0.0
        %658 = vmatpush.xpose.msra.mxu0 0.0
        %659 = vmatpush.xpose.msra.mxu0 0.0
        %660 = vmatpush.xpose.msra.mxu0 0.0
        %661 = vmatpush.xpose.msra.mxu0 0.0
        %662 = vmatpush.xpose.msra.mxu0 0.0
        %663 = vmatpush.xpose.msra.mxu0 0.0
        %664 = vmatpush.xpose.msra.mxu0 0.0
        %665 = vmatpush.xpose.msra.mxu0 %v648
        %666 = vmatmul.f32.gmra.mxu0 %v645
        %v667 = vpop.f32.mrf.mxu0
        %v668 = vadd.f32 0.0, %v667
        %669 = vdwg.mxu0
        %vm670 = vcmask 64512
        %v671 = vsel %vm670, %v668, -inf
        %672 = vmax.xlane.f32.xlu0 %v671
        %v673 = vpop.xlane.xlu0 %672
        %v674 = vsub.f32 %v668, %v673
        %v675 = vmul.f32 %v674, 1.442695
        %v676 = vpow.pop %v675
        %v677 = vsel %vm670, %v676, 0.0
        %678 = vadd.xlane.f32.xlu0 %v677
        %v679 = vpop.xlane.xlu0 %678
        %v680 = vrcp.pop %v679
        %v681 = vmul.f32 %v676, %v680
        %682 = vst.msk [vmem:[%s535] sm:$0xff] %vm670, %v681
        %v684 = vsel %vm670, %v681, 0
        %686 = vmatpush.msra.mxu0 0.0
        %687 = vmatpush.msra.mxu0 0.0
        %688 = vmatpush.msra.mxu0 0.0
        %689 = vmatpush.msra.mxu0 0.0
        %690 = vmatpush.msra.mxu0 0.0
        %691 = vmatpush.msra.mxu0 0.0
        %692 = vmatpush.msra.mxu0 0.0
        %693 = vmatpush.msra.mxu0 0.0
        %694 = vmatpush.msra.mxu0 0.0
        %695 = vmatpush.msra.mxu0 0.0
        %696 = vmatpush.msra.mxu0 0.0
        %697 = vmatpush.msra.mxu0 0.0
        %698 = vmatpush.msra.mxu0 0.0
        %699 = vmatpush.msra.mxu0 0.0
        %700 = vmatpush.msra.mxu0 0.0
        %701 = vmatpush.msra.mxu0 %v642
        %702 = vmatmul.f32.gmra.mxu0 %v684
        %v703 = vpop.f32.mrf.mxu0
        %v704 = vadd.f32 0.0, %v703
        %705 = vdwg.mxu0
        %706 = vst.msk [vmem:[#allocation4] sm:$0xff] %vm643, %v704
        %707 = vrot.lane.b32.xlu0 %v639, 112
        %v708 = vpop.permute.xlu0 %707
        %709 = vrot.lane.b32.xlu0 %v641, 112
        %v710 = vpop.permute.xlu0 %709
        %v711 = vsel %vm643, %v708, 0
        %v713 = vsel %vm643, %v710, 0
        %715 = vmatpush.xpose.msra.mxu0 0.0
        %716 = vmatpush.xpose.msra.mxu0 0.0
        %717 = vmatpush.xpose.msra.mxu0 0.0
        %718 = vmatpush.xpose.msra.mxu0 0.0
        %719 = vmatpush.xpose.msra.mxu0 0.0
        %720 = vmatpush.xpose.msra.mxu0 0.0
        %721 = vmatpush.xpose.msra.mxu0 0.0
        %722 = vmatpush.xpose.msra.mxu0 0.0
        %723 = vmatpush.xpose.msra.mxu0 0.0
        %724 = vmatpush.xpose.msra.mxu0 0.0
        %725 = vmatpush.xpose.msra.mxu0 0.0
        %726 = vmatpush.xpose.msra.mxu0 0.0
        %727 = vmatpush.xpose.msra.mxu0 0.0
        %728 = vmatpush.xpose.msra.mxu0 0.0
        %729 = vmatpush.xpose.msra.mxu0 0.0
        %730 = vmatpush.xpose.msra.mxu0 %v713
        %731 = vmatmul.f32.gmra.mxu0 %v711
        %v732 = vpop.f32.mrf.mxu0
        %v733 = vadd.f32 0.0, %v732
        %734 = vdwg.mxu0
        %v735 = vsel %vm670, %v733, -inf
        %736 = vmax.xlane.f32.xlu0 %v735
        %v737 = vpop.xlane.xlu0 %736
        %v738 = vsub.f32 %v733, %v737
        %v739 = vmul.f32 %v738, 1.442695
        %v740 = vpow.pop %v739
        %v741 = vsel %vm670, %v740, 0.0
        %742 = vadd.xlane.f32.xlu0 %v741
        %v743 = vpop.xlane.xlu0 %742
        %v744 = vrcp.pop %v743
        %v745 = vmul.f32 %v740, %v744
        %747 = vrot.lane.b32.xlu0 %v745, 8
        %v748 = vpop.permute.xlu0 %747
        %vm750 = vcmask 130112
        %751 = vst.msk [vmem:[%s535] sm:$0xff] %vm750, %v748
        %753 = vrot.lane.b32.xlu0 %v642, 112
        %v754 = vpop.permute.xlu0 %753
        %v756 = vsel %vm670, %v745, 0
        %758 = vmatpush.msra.mxu0 0.0
        %759 = vmatpush.msra.mxu0 0.0
        %760 = vmatpush.msra.mxu0 0.0
        %761 = vmatpush.msra.mxu0 0.0
        %762 = vmatpush.msra.mxu0 0.0
        %763 = vmatpush.msra.mxu0 0.0
        %764 = vmatpush.msra.mxu0 0.0
        %765 = vmatpush.msra.mxu0 0.0
        %766 = vmatpush.msra.mxu0 0.0
        %767 = vmatpush.msra.mxu0 0.0
        %768 = vmatpush.msra.mxu0 0.0
        %769 = vmatpush.msra.mxu0 0.0
        %770 = vmatpush.msra.mxu0 0.0
        %771 = vmatpush.msra.mxu0 0.0
        %772 = vmatpush.msra.mxu0 0.0
        %773 = vmatpush.msra.mxu0 %v754
        %774 = vmatmul.f32.gmra.mxu0 %v756
        %v775 = vpop.f32.mrf.mxu0
        %v776 = vadd.f32 0.0, %v775
        %777 = vdwg.mxu0
        %779 = vrot.lane.b32.xlu0 %v776, 16
        %v780 = vpop.permute.xlu0 %779
        %vm782 = vcmask 261248
        %783 = vst.msk [vmem:[#allocation4] sm:$0xff] %vm782, %v780
        %784 = vrot.lane.b32.xlu0 %v639, 96
        %v785 = vpop.permute.xlu0 %784
        %786 = vrot.lane.b32.xlu0 %v641, 96
        %v787 = vpop.permute.xlu0 %786
        %v788 = vsel %vm643, %v785, 0
        %v790 = vsel %vm643, %v787, 0
        %792 = vmatpush.xpose.msra.mxu0 0.0
        %793 = vmatpush.xpose.msra.mxu0 0.0
        %794 = vmatpush.xpose.msra.mxu0 0.0
        %795 = vmatpush.xpose.msra.mxu0 0.0
        %796 = vmatpush.xpose.msra.mxu0 0.0
        %797 = vmatpush.xpose.msra.mxu0 0.0
        %798 = vmatpush.xpose.msra.mxu0 0.0
        %799 = vmatpush.xpose.msra.mxu0 0.0
        %800 = vmatpush.xpose.msra.mxu0 0.0
        %801 = vmatpush.xpose.msra.mxu0 0.0
        %802 = vmatpush.xpose.msra.mxu0 0.0
        %803 = vmatpush.xpose.msra.mxu0 0.0
        %804 = vmatpush.xpose.msra.mxu0 0.0
        %805 = vmatpush.xpose.msra.mxu0 0.0
        %806 = vmatpush.xpose.msra.mxu0 0.0
        %807 = vmatpush.xpose.msra.mxu0 %v790
        %808 = vmatmul.f32.gmra.mxu0 %v788
        %v809 = vpop.f32.mrf.mxu0
        %v810 = vadd.f32 0.0, %v809
        %811 = vdwg.mxu0
        %v812 = vsel %vm670, %v810, -inf
        %813 = vmax.xlane.f32.xlu0 %v812
        %v814 = vpop.xlane.xlu0 %813
        %v815 = vsub.f32 %v810, %v814
        %v816 = vmul.f32 %v815, 1.442695
        %v817 = vpow.pop %v816
        %v818 = vsel %vm670, %v817, 0.0
        %819 = vadd.xlane.f32.xlu0 %v818
        %v820 = vpop.xlane.xlu0 %819
        %v821 = vrcp.pop %v820
        %v822 = vmul.f32 %v817, %v821
        %824 = vrot.lane.b32.xlu0 %v822, 16
        %v825 = vpop.permute.xlu0 %824
        %vm827 = vcmask 195712
        %828 = vst.msk [vmem:[%s535] sm:$0xff] %vm827, %v825
        %829 = vrot.lane.b32.xlu0 %v642, 96
        %v830 = vpop.permute.xlu0 %829
        %v832 = vsel %vm670, %v822, 0
        %834 = vmatpush.msra.mxu0 0.0
        %835 = vmatpush.msra.mxu0 0.0
        %836 = vmatpush.msra.mxu0 0.0
        %837 = vmatpush.msra.mxu0 0.0
        %838 = vmatpush.msra.mxu0 0.0
        %839 = vmatpush.msra.mxu0 0.0
        %840 = vmatpush.msra.mxu0 0.0
        %841 = vmatpush.msra.mxu0 0.0
        %842 = vmatpush.msra.mxu0 0.0
        %843 = vmatpush.msra.mxu0 0.0
        %844 = vmatpush.msra.mxu0 0.0
        %845 = vmatpush.msra.mxu0 0.0
        %846 = vmatpush.msra.mxu0 0.0
        %847 = vmatpush.msra.mxu0 0.0
        %848 = vmatpush.msra.mxu0 0.0
        %849 = vmatpush.msra.mxu0 %v830
        %850 = vmatmul.f32.gmra.mxu0 %v832
        %v851 = vpop.f32.mrf.mxu0
        %v852 = vadd.f32 0.0, %v851
        %853 = vdwg.mxu0
        %855 = vrot.lane.b32.xlu0 %v852, 32
        %v856 = vpop.permute.xlu0 %855
        %vm858 = vcmask 392448
        %859 = vst.msk [vmem:[#allocation4] sm:$0xff] %vm858, %v856
        %860 = vrot.lane.b32.xlu0 %v639, 80
        %v861 = vpop.permute.xlu0 %860
        %862 = vrot.lane.b32.xlu0 %v641, 80
        %v863 = vpop.permute.xlu0 %862
        %v864 = vsel %vm643, %v861, 0
        %v866 = vsel %vm643, %v863, 0
        %868 = vmatpush.xpose.msra.mxu0 0.0
        %869 = vmatpush.xpose.msra.mxu0 0.0
        %870 = vmatpush.xpose.msra.mxu0 0.0
        %871 = vmatpush.xpose.msra.mxu0 0.0
        %872 = vmatpush.xpose.msra.mxu0 0.0
        %873 = vmatpush.xpose.msra.mxu0 0.0
        %874 = vmatpush.xpose.msra.mxu0 0.0
        %875 = vmatpush.xpose.msra.mxu0 0.0
        %876 = vmatpush.xpose.msra.mxu0 0.0
        %877 = vmatpush.xpose.msra.mxu0 0.0
        %878 = vmatpush.xpose.msra.mxu0 0.0
        %879 = vmatpush.xpose.msra.mxu0 0.0
        %880 = vmatpush.xpose.msra.mxu0 0.0
        %881 = vmatpush.xpose.msra.mxu0 0.0
        %882 = vmatpush.xpose.msra.mxu0 0.0
        %883 = vmatpush.xpose.msra.mxu0 %v866
        %884 = vmatmul.f32.gmra.mxu0 %v864
        %v885 = vpop.f32.mrf.mxu0
        %v886 = vadd.f32 0.0, %v885
        %887 = vdwg.mxu0
        %v888 = vsel %vm670, %v886, -inf
        %889 = vmax.xlane.f32.xlu0 %v888
        %v890 = vpop.xlane.xlu0 %889
        %v891 = vsub.f32 %v886, %v890
        %v892 = vmul.f32 %v891, 1.442695
        %v893 = vpow.pop %v892
        %v894 = vsel %vm670, %v893, 0.0
        %895 = vadd.xlane.f32.xlu0 %v894
        %v896 = vpop.xlane.xlu0 %895
        %v897 = vrcp.pop %v896
        %v898 = vmul.f32 %v893, %v897
        %900 = vrot.lane.b32.xlu0 %v898, 24
        %v901 = vpop.permute.xlu0 %900
        %vm903 = vcmask 261312
        %904 = vst.msk [vmem:[%s535] sm:$0xff] %vm903, %v901
        %905 = vrot.lane.b32.xlu0 %v642, 80
        %v906 = vpop.permute.xlu0 %905
        %v908 = vsel %vm670, %v898, 0
        %910 = vmatpush.msra.mxu0 0.0
        %911 = vmatpush.msra.mxu0 0.0
        %912 = vmatpush.msra.mxu0 0.0
        %913 = vmatpush.msra.mxu0 0.0
        %914 = vmatpush.msra.mxu0 0.0
        %915 = vmatpush.msra.mxu0 0.0
        %916 = vmatpush.msra.mxu0 0.0
        %917 = vmatpush.msra.mxu0 0.0
        %918 = vmatpush.msra.mxu0 0.0
        %919 = vmatpush.msra.mxu0 0.0
        %920 = vmatpush.msra.mxu0 0.0
        %921 = vmatpush.msra.mxu0 0.0
        %922 = vmatpush.msra.mxu0 0.0
        %923 = vmatpush.msra.mxu0 0.0
        %924 = vmatpush.msra.mxu0 0.0
        %925 = vmatpush.msra.mxu0 %v906
        %926 = vmatmul.f32.gmra.mxu0 %v908
        %v927 = vpop.f32.mrf.mxu0
        %v928 = vadd.f32 0.0, %v927
        %929 = vdwg.mxu0
        %931 = vrot.lane.b32.xlu0 %v928, 48
        %v932 = vpop.permute.xlu0 %931
        %vm934 = vcmask 523648
        %935 = vst.msk [vmem:[#allocation4] sm:$0xff] %vm934, %v932
        %v936 = vld [vmem:[#allocation4] sm:$0xff]
        %v937 = vld [vmem:[%s9] sm:$0xff]
        %v938 = vld [vmem:[%s9 + $0x8] sm:$0xff]
        %v939 = vld [vmem:[%s9 + $0x10] sm:$0xff]
        %v940 = vld [vmem:[%s9 + $0x18] sm:$0xff]
        %v941 = vld [vmem:[%s9 + $0x20] sm:$0xff]
        %v942 = vld [vmem:[%s9 + $0x28] sm:$0xff]
        %v943 = vld [vmem:[%s9 + $0x30] sm:$0xff]
        %v944 = vld [vmem:[%s9 + $0x38] sm:$0xff]
        %v945 = vld [vmem:[%s10] sm:$0x1]
        %v947 = vperm.slane %v945, 0
        %vm949 = vcmask 523264
        %v951 = vsel %vm949, %v936, 0
        %953 = vmatpush.msra.mxu0 0.0
        %954 = vmatpush.msra.mxu0 0.0
        %955 = vmatpush.msra.mxu0 0.0
        %956 = vmatpush.msra.mxu0 0.0
        %957 = vmatpush.msra.mxu0 0.0
        %958 = vmatpush.msra.mxu0 0.0
        %959 = vmatpush.msra.mxu0 0.0
        %960 = vmatpush.msra.mxu0 0.0
        %961 = vmatpush.msra.mxu0 %v944
        %962 = vmatpush.msra.mxu0 %v943
        %963 = vmatpush.msra.mxu0 %v942
        %964 = vmatpush.msra.mxu0 %v941
        %965 = vmatpush.msra.mxu0 %v940
        %966 = vmatpush.msra.mxu0 %v939
        %967 = vmatpush.msra.mxu0 %v938
        %968 = vmatpush.msra.mxu0 %v937
        %969 = vmatmul.f32.gmra.mxu0 %v951
        %v970 = vpop.f32.mrf.mxu0
        %v971 = vadd.f32 %v947, %v970
        %972 = vdwg.mxu0
        %973 = vst.msk [vmem:[%s528] sm:$0xff] %vm617, %v971
        %s974 = sand.u32 %s306, 1
        %s975 = scalar_lea.sflag [#allocation7], %s974
        %s976 = sand.u32 %s306, 1
        %s977 = smul.addr %s976, 8
        %s978 = scalar_lea.vmem [#allocation11], %s977
        %s979 = sand.u32 %s334, 1
        %s980 = scalar_lea.sflag [#allocation13], %s979
        %s981 = sand.u32 %s334, 1
        %s982 = smul.addr %s981, 8
        %s983 = scalar_lea.vmem [#allocation12], %s982
        // Predicated region
        $region81: #{tpu_custom_call.1} parent=63 // pred_check
          %p984 = pneg %p316
        $region82: #{tpu_custom_call.1} parent=63 // pred_check_branch
          %986 = sbr.rel (%p984) target = $region84
        $region83: #{tpu_custom_call.1} parent=63 // pred_region
          %988 = vsyncadd %s975, 0
          %s989 = sadd.s32 %s41, %s40
          %s990 = smul.addr %s989, 8
          %s991 = scalar_lea.hbm %s11, %s990
          %s993 = sshll.u32 %s978, 4
          %s994 = int_to_ptr.vmem [resolvable:$true] %s993
          %s995 = sshll.u32 %s991, 4
          %s996 = int_to_ptr.hbm [resolvable:$true] %s995
          %998 = dma.vmem_to_hbm [thread:$0]  %s994, 128, %s996, %s975
        $region84: #{tpu_custom_call.1} parent=63 // pred_fallthru
          _
        // Predicated region
        $region85: #{tpu_custom_call.1} parent=63 // pred_check
          %p999 = pneg %p344
        $region86: #{tpu_custom_call.1} parent=63 // pred_check_branch
          %1001 = sbr.rel (%p999) target = $region88
        $region87: #{tpu_custom_call.1} parent=63 // pred_region
          %1003 = vsyncadd %s980, 0
          %s1004 = sadd.s32 %s41, %s40
          %s1005 = smul.addr %s1004, 8
          %s1006 = scalar_lea.hbm %s12, %s1005
          %s1008 = sshll.u32 %s983, 4
          %s1009 = int_to_ptr.vmem [resolvable:$true] %s1008
          %s1010 = sshll.u32 %s1006, 4
          %s1011 = int_to_ptr.hbm [resolvable:$true] %s1010
          %1013 = dma.vmem_to_hbm [thread:$0]  %s1009, 128, %s1011, %s980
        $region88: #{tpu_custom_call.1} parent=63 // pred_fallthru
          _
      $region64: #{tpu_custom_call.1} parent=5 // pred_fallthru
        _
      %p1014 = scmp.le.s32.totalorder 2, %s31
      // Predicated region
      $region89: #{tpu_custom_call.1} parent=5 // pred_check
        %p1015 = pneg %p1014
      $region90: #{tpu_custom_call.1} parent=5 // pred_check_branch
        %1017 = sbr.rel (%p1015) target = $region92
      $region91: #{tpu_custom_call.1} parent=5 // pred_region
        %s1018 = ssub.s32 %s31, 2
        // Predicated region
        $region93: #{tpu_custom_call.1} parent=91 // pred_check
          %p1019 = pneg %p322
        $region94: #{tpu_custom_call.1} parent=91 // pred_check_branch
          %1021 = sbr.rel (%p1019) target = $region96
        $region95: #{tpu_custom_call.1} parent=91 // pred_region
          %s1022 = sand.u32 %s307, 1
          %s1023 = scalar_lea.sflag [#allocation7], %s1022
          %s1024 = sand.u32 %s307, 1
          %s1025 = smul.addr %s1024, 8
          %s1026 = scalar_lea.vmem [#allocation11], %s1025
          %1028 = dma.done %s1023, 128
        $region96: #{tpu_custom_call.1} parent=91 // pred_fallthru
          _
        // Predicated region
        $region97: #{tpu_custom_call.1} parent=91 // pred_check
          %p1029 = pneg %p350
        $region98: #{tpu_custom_call.1} parent=91 // pred_check_branch
          %1031 = sbr.rel (%p1029) target = $region100
        $region99: #{tpu_custom_call.1} parent=91 // pred_region
          %s1032 = sand.u32 %s335, 1
          %s1033 = scalar_lea.sflag [#allocation13], %s1032
          %s1034 = sand.u32 %s335, 1
          %s1035 = smul.addr %s1034, 8
          %s1036 = scalar_lea.vmem [#allocation12], %s1035
          %1038 = dma.done %s1033, 128
        $region100: #{tpu_custom_call.1} parent=91 // pred_fallthru
          _
      $region92: #{tpu_custom_call.1} parent=5 // pred_fallthru
        _
    $region6: #{tpu_custom_call.1} parent=1 // loop_footer
      %s35 = sadd.s32 1, %s31
    $region7: #{tpu_custom_call.1} parent=1 // loop_footer_branch
      %30 = sbr.rel target = $region3
    $region8: #{tpu_custom_call.1} parent=1 // loop_exit
      _
    %1039 = vsyncpa [#allocation6], 1
    %s1040 = scalar_lea.sflag [#allocation6], 1
    %1041 = vsyncpa %s1040, 1
    %1042 = vsyncpa [#allocation9], 1
    %s1043 = scalar_lea.sflag [#allocation9], 1
    %1044 = vsyncpa %s1043, 1
    %1045 = vsyncpa [#allocation7], 1
    %s1046 = scalar_lea.sflag [#allocation7], 1
    %1047 = vsyncpa %s1046, 1
    %1048 = vsyncpa [#allocation13], 1
    %s1049 = scalar_lea.sflag [#allocation13], 1
    %1050 = vsyncpa %s1049, 1

</llo_original>
